<compile_context>
chip_gen: v7x
topology: tpu7x:2x2x1
jax: 0.10.0
libtpu: 0.0.40
codegen_flags: <defaults>
</compile_context>

<pallas_src>
import jax
import jax.numpy as jnp
from jax.experimental import pallas as pl
from jax.experimental.pallas import tpu as pltpu


def _decoder_lstm_kernel(x_ref, h0_ref, c0_ref, wih_ref, whh_ref, b_ref,
                         wout_ref, bout_ref,
                         out0_ref, hn_ref, cn_ref,
                         gx_ref):
    """Single invocation: batched input projection + unrolled recurrence."""
    TB, _ = x_ref.shape                 # (T*B, I)
    B, H = hn_ref.shape
    T = TB // B

    wih = wih_ref[...]                  # (I, 4H)
    whh = whh_ref[...]                  # (H, 4H)
    wout = wout_ref[...]                # (H, O)

    # ---- Pass 1: time-parallel input projection (one MXU op for all T). ----
    # gates_x = ReLU(x) @ W_ih^T + (b_ih + b_hh), shape (T*B, 4H), f32 accum.
    x_all = jnp.maximum(x_ref[...], 0.0).astype(wih.dtype)
    gx_ref[...] = (jnp.dot(x_all, wih, preferred_element_type=jnp.float32)
                   + b_ref[...])

    # ---- LSTM cell (gate order [i, f, g, o], matching torch). ----
    def cell(h_prev, c_prev, gx):
        gates = (jnp.dot(h_prev.astype(whh.dtype), whh,
                         preferred_element_type=jnp.float32)
                 + gx)                                   # (B, 4H), f32
        # NOTE: at H < 128 these are masked-lane slices; pad H to a multiple
        # of 128 for large models to keep gate slices whole-vreg.
        i_g = jax.nn.sigmoid(gates[:, 0 * H:1 * H])
        f_g = jax.nn.sigmoid(gates[:, 1 * H:2 * H])
        g_g = jnp.tanh(gates[:, 2 * H:3 * H])
        o_g = jax.nn.sigmoid(gates[:, 3 * H:4 * H])
        c_new = f_g * c_prev + i_g * g_g
        h_new = o_g * jnp.tanh(c_new)
        return h_new, c_new

    # ---- Step t = 0 (hoisted: out[0] = Linear(h after the first step)). ----
    h1, c1 = cell(h0_ref[...], c0_ref[...], gx_ref[pl.ds(0, B), :])
    out0_ref[...] = (jnp.dot(h1.astype(wout.dtype), wout,
                             preferred_element_type=jnp.float32)
                     + bout_ref[...])
    hn_ref[...] = h1
    cn_ref[...] = c1

    # ---- Steps 1 .. T-1: state lives directly in hn_ref / cn_ref. ----
    def step(t, carry):
        gx_t = gx_ref[pl.ds(t * B, B), :]                # (B, 4H)
        h_new, c_new = cell(hn_ref[...], cn_ref[...], gx_t)
        hn_ref[...] = h_new
        cn_ref[...] = c_new
        return carry

    jax.lax.fori_loop(1, T, step, 0, unroll=True)


def decoder_lstm_forward(x, hidden, params, *, param_dtype=jnp.float32):
    """x: (T, B, I); hidden = (h0, c0) each (1, B, H); params dict.

    Set param_dtype=jnp.bfloat16 on v6e/v7x at large H to halve resident weight
    VMEM and use the full-rate bf16 MXU path (f32 accumulation either way).
    """
    T, B, I = x.shape
    h0, c0 = hidden
    H = h0.shape[-1]
    O = params["b_out"].shape[-1]

    # Weight / layout prep (glue, outside the kernel).
    wih_t = params["w_ih"].T.astype(param_dtype)                       # (I, 4H)
    whh_t = params["w_hh"].T.astype(param_dtype)                       # (H, 4H)
    b = (params["b_ih"] + params["b_hh"]).astype(jnp.float32).reshape(1, 4 * H)
    wout_t = params["w_out"].T.astype(param_dtype)                     # (H, O)
    bout = params["b_out"].astype(jnp.float32).reshape(1, O)
    x2d = x.astype(jnp.float32).reshape(T * B, I)                      # time-major flatten

    full2 = lambda i: (0, 0)

    out0, h_n, c_n = pl.pallas_call(
        _decoder_lstm_kernel,
        out_shape=(
            jax.ShapeDtypeStruct((B, O), jnp.float32),   # out[0]
            jax.ShapeDtypeStruct((B, H), jnp.float32),   # h_n
            jax.ShapeDtypeStruct((B, H), jnp.float32),   # c_n
        ),
        grid_spec=pltpu.PrefetchScalarGridSpec(
            num_scalar_prefetch=0,
            grid=(1,),                                   # whole recurrence in one step
            in_specs=[
                pl.BlockSpec((T * B, I), full2),         # ReLU input, flattened over time
                pl.BlockSpec((B, H), full2),             # h0
                pl.BlockSpec((B, H), full2),             # c0
                pl.BlockSpec((I, 4 * H), full2),         # W_ih^T
                pl.BlockSpec((H, 4 * H), full2),         # W_hh^T
                pl.BlockSpec((1, 4 * H), full2),         # b_ih + b_hh
                pl.BlockSpec((H, O), full2),             # W_out^T
                pl.BlockSpec((1, O), full2),             # b_out
            ],
            out_specs=[
                pl.BlockSpec((B, O), full2),
                pl.BlockSpec((B, H), full2),
                pl.BlockSpec((B, H), full2),
            ],
            scratch_shapes=[
                pltpu.VMEM((T * B, 4 * H), jnp.float32),  # precomputed input gates
            ],
        ),
        compiler_params=pltpu.CompilerParams(
            # Recurrence is sequential; at large H consider also setting
            # vmem_limit_bytes explicitly (v7x has 64 MiB physical VMEM).
            dimension_semantics=("arbitrary",),
        ),
    )(x2d, h0[0].astype(jnp.float32), c0[0].astype(jnp.float32),
      wih_t, whh_t, b, wout_t, bout)

    return out0, (h_n[None], c_n[None])


def _reference_forward(x, hidden, params):
    """Pure-JAX reference mirroring the PyTorch forward (f32)."""
    h, c = hidden[0][0], hidden[1][0]
    H = h.shape[-1]
    x = jnp.maximum(x, 0.0)
    outs = []
    for t in range(x.shape[0]):
        gates = (x[t] @ params["w_ih"].T + params["b_ih"]
                 + h @ params["w_hh"].T + params["b_hh"])
        i_g = jax.nn.sigmoid(gates[:, 0 * H:1 * H])
        f_g = jax.nn.sigmoid(gates[:, 1 * H:2 * H])
        g_g = jnp.tanh(gates[:, 2 * H:3 * H])
        o_g = jax.nn.sigmoid(gates[:, 3 * H:4 * H])
        c = f_g * c + i_g * g_g
        h = o_g * jnp.tanh(c)
        outs.append(h)
    out = jnp.stack(outs) @ params["w_out"].T + params["b_out"]
    return out[0], (h[None], c[None])


if __name__ == "__main__":
    # Small shapes consistent with the module's forward.
    T, B, I, H, O = 8, 2, 16, 32, 16

    key = jax.random.PRNGKey(0)
    ks = jax.random.split(key, 8)
    bound = 1.0 / (H ** 0.5)
    params = {
        "w_ih": jax.random.uniform(ks[0], (4 * H, I), jnp.float32, -bound, bound),
        "w_hh": jax.random.uniform(ks[1], (4 * H, H), jnp.float32, -bound, bound),
        "b_ih": jax.random.uniform(ks[2], (4 * H,), jnp.float32, -bound, bound),
        "b_hh": jax.random.uniform(ks[3], (4 * H,), jnp.float32, -bound, bound),
        "w_out": jax.random.uniform(ks[4], (O, H), jnp.float32, -bound, bound),
        "b_out": jax.random.uniform(ks[5], (O,), jnp.float32, -bound, bound),
    }

    x = jax.random.normal(ks[6], (T, B, I), jnp.float32)
    # initHidden: zeros (and a zero cell state, as nn.LSTM expects a (h0, c0) tuple)
    h0 = jnp.zeros((1, B, H), jnp.float32)
    c0 = jnp.zeros((1, B, H), jnp.float32)

    out0, (h_n, c_n) = decoder_lstm_forward(x, (h0, c0), params)
    jax.block_until_ready((out0, h_n, c_n))

    ref_out0, (ref_hn, ref_cn) = _reference_forward(x, (h0, c0), params)
    assert jnp.allclose(out0, ref_out0, atol=1e-5), "out[0] mismatch"
    assert jnp.allclose(h_n, ref_hn, atol=1e-5), "h_n mismatch"
    assert jnp.allclose(c_n, ref_cn, atol=1e-5), "c_n mismatch"

    print("KERNEL_OK")
</pallas_src>

<mosaic_0001>
module attributes {stable_mosaic.version = 11 : i64} {
  func.func @_decoder_lstm_kernel(%arg0: i32, %arg1: memref<16x16xf32, #tpu.memory_space<vmem>>, %arg2: memref<2x32xf32, #tpu.memory_space<vmem>>, %arg3: memref<2x32xf32, #tpu.memory_space<vmem>>, %arg4: memref<16x128xf32, #tpu.memory_space<vmem>>, %arg5: memref<32x128xf32, #tpu.memory_space<vmem>>, %arg6: memref<1x128xf32, #tpu.memory_space<vmem>>, %arg7: memref<32x16xf32, #tpu.memory_space<vmem>>, %arg8: memref<1x16xf32, #tpu.memory_space<vmem>>, %arg9: memref<2x16xf32, #tpu.memory_space<vmem>>, %arg10: memref<2x32xf32, #tpu.memory_space<vmem>>, %arg11: memref<2x32xf32, #tpu.memory_space<vmem>>, %arg12: memref<16x128xf32, #tpu.memory_space<vmem>>) attributes {dimension_semantics = [#tpu.dimension_semantics<arbitrary>], iteration_bounds = array<i64: 1>, scalar_prefetch = 0 : i64, scratch_operands = 1 : i64, tpu.core_type = #tpu.core_type<tc>, window_params = [{pipeline_mode = #tpu.pipeline_mode<synchronous>, transform_indices = @transform_0, window_bounds = array<i64: 16, 16>}, {pipeline_mode = #tpu.pipeline_mode<synchronous>, transform_indices = @transform_1, window_bounds = array<i64: 2, 32>}, {pipeline_mode = #tpu.pipeline_mode<synchronous>, transform_indices = @transform_2, window_bounds = array<i64: 2, 32>}, {pipeline_mode = #tpu.pipeline_mode<synchronous>, transform_indices = @transform_3, window_bounds = array<i64: 16, 128>}, {pipeline_mode = #tpu.pipeline_mode<synchronous>, transform_indices = @transform_4, window_bounds = array<i64: 32, 128>}, {pipeline_mode = #tpu.pipeline_mode<synchronous>, transform_indices = @transform_5, window_bounds = array<i64: 1, 128>}, {pipeline_mode = #tpu.pipeline_mode<synchronous>, transform_indices = @transform_6, window_bounds = array<i64: 32, 16>}, {pipeline_mode = #tpu.pipeline_mode<synchronous>, transform_indices = @transform_7, window_bounds = array<i64: 1, 16>}, {pipeline_mode = #tpu.pipeline_mode<synchronous>, transform_indices = @transform_8, window_bounds = array<i64: 2, 16>}, {pipeline_mode = #tpu.pipeline_mode<synchronous>, transform_indices = @transform_9, window_bounds = array<i64: 2, 32>}, {pipeline_mode = #tpu.pipeline_mode<synchronous>, transform_indices = @transform_10, window_bounds = array<i64: 2, 32>}]} {
    %c0 = arith.constant 0 : index
    %c0_0 = arith.constant 0 : index
    %0 = vector.load %arg4[%c0, %c0_0] : memref<16x128xf32, #tpu.memory_space<vmem>>, vector<16x128xf32>
    %c0_1 = arith.constant 0 : index
    %c0_2 = arith.constant 0 : index
    %1 = vector.load %arg5[%c0_1, %c0_2] : memref<32x128xf32, #tpu.memory_space<vmem>>, vector<32x128xf32>
    %c0_3 = arith.constant 0 : index
    %c0_4 = arith.constant 0 : index
    %2 = vector.load %arg7[%c0_3, %c0_4] : memref<32x16xf32, #tpu.memory_space<vmem>>, vector<32x16xf32>
    %c0_5 = arith.constant 0 : index
    %c0_6 = arith.constant 0 : index
    %3 = vector.load %arg1[%c0_5, %c0_6] : memref<16x16xf32, #tpu.memory_space<vmem>>, vector<16x16xf32>
    %cst = arith.constant 0.000000e+00 : f32
    %4 = vector.broadcast %cst : f32 to vector<16x16xf32>
    %5 = arith.maximumf %3, %4 : vector<16x16xf32>
    %cst_7 = arith.constant dense<0.000000e+00> : vector<16x128xf32>
    %6 = tpu.matmul %5, %0, %cst_7 {dimension_numbers = #tpu.dot_dimension_numbers<[1], [0], [0], [1], [0, 0, 1, 1], [], []>} : vector<16x16xf32>, vector<16x128xf32>, vector<16x128xf32> -> vector<16x128xf32>
    %c0_8 = arith.constant 0 : index
    %c0_9 = arith.constant 0 : index
    %7 = vector.load %arg6[%c0_8, %c0_9] : memref<1x128xf32, #tpu.memory_space<vmem>>, vector<1x128xf32>
    %8 = vector.broadcast %7 : vector<1x128xf32> to vector<16x128xf32>
    %9 = arith.addf %6, %8 : vector<16x128xf32>
    %c0_10 = arith.constant 0 : index
    %c0_11 = arith.constant 0 : index
    %10 = vector.load %arg12[%c0_10, %c0_11] : memref<16x128xf32, #tpu.memory_space<vmem>>, vector<16x128xf32>
    tpu.vector_store %arg12[%c0_10, %c0_11], %9 {strides = array<i32>} : memref<16x128xf32, #tpu.memory_space<vmem>>, vector<16x128xf32>,
    %c0_12 = arith.constant 0 : index
    %c0_13 = arith.constant 0 : index
    %11 = vector.load %arg2[%c0_12, %c0_13] : memref<2x32xf32, #tpu.memory_space<vmem>>, vector<2x32xf32>
    %c0_14 = arith.constant 0 : index
    %c0_15 = arith.constant 0 : index
    %12 = vector.load %arg3[%c0_14, %c0_15] : memref<2x32xf32, #tpu.memory_space<vmem>>, vector<2x32xf32>
    %c0_16 = arith.constant 0 : index
    %c0_17 = arith.constant 0 : index
    %13 = vector.load %arg12[%c0_16, %c0_17] : memref<16x128xf32, #tpu.memory_space<vmem>>, vector<2x128xf32>
    %cst_18 = arith.constant dense<0.000000e+00> : vector<2x128xf32>
    %14 = tpu.matmul %11, %1, %cst_18 {dimension_numbers = #tpu.dot_dimension_numbers<[1], [0], [0], [1], [0, 0, 1, 1], [], []>} : vector<2x32xf32>, vector<32x128xf32>, vector<2x128xf32> -> vector<2x128xf32>
    %15 = arith.addf %14, %13 : vector<2x128xf32>
    %16 = vector.extract_strided_slice %15 {offsets = [0, 0], sizes = [2, 32], strides = [1, 1]} : vector<2x128xf32> to vector<2x32xf32>
    %17 = arith.negf %16 : vector<2x32xf32>
    %18 = math.exp %17 : vector<2x32xf32>
    %cst_19 = arith.constant 1.000000e+00 : f32
    %19 = vector.broadcast %cst_19 : f32 to vector<2x32xf32>
    %20 = arith.addf %19, %18 : vector<2x32xf32>
    %21 = arith.divf %19, %20 : vector<2x32xf32>
    %22 = vector.extract_strided_slice %15 {offsets = [0, 32], sizes = [2, 32], strides = [1, 1]} : vector<2x128xf32> to vector<2x32xf32>
    %23 = arith.negf %22 : vector<2x32xf32>
    %24 = math.exp %23 : vector<2x32xf32>
    %cst_20 = arith.constant 1.000000e+00 : f32
    %25 = vector.broadcast %cst_20 : f32 to vector<2x32xf32>
    %26 = arith.addf %25, %24 : vector<2x32xf32>
    %27 = arith.divf %25, %26 : vector<2x32xf32>
    %28 = vector.extract_strided_slice %15 {offsets = [0, 64], sizes = [2, 32], strides = [1, 1]} : vector<2x128xf32> to vector<2x32xf32>
    %29 = math.tanh %28 : vector<2x32xf32>
    %30 = vector.extract_strided_slice %15 {offsets = [0, 96], sizes = [2, 32], strides = [1, 1]} : vector<2x128xf32> to vector<2x32xf32>
    %31 = arith.negf %30 : vector<2x32xf32>
    %32 = math.exp %31 : vector<2x32xf32>
    %cst_21 = arith.constant 1.000000e+00 : f32
    %33 = vector.broadcast %cst_21 : f32 to vector<2x32xf32>
    %34 = arith.addf %33, %32 : vector<2x32xf32>
    %35 = arith.divf %33, %34 : vector<2x32xf32>
    %36 = arith.mulf %27, %12 : vector<2x32xf32>
    %37 = arith.mulf %21, %29 : vector<2x32xf32>
    %38 = arith.addf %36, %37 : vector<2x32xf32>
    %39 = math.tanh %38 : vector<2x32xf32>
    %40 = arith.mulf %35, %39 : vector<2x32xf32>
    %cst_22 = arith.constant dense<0.000000e+00> : vector<2x16xf32>
    %41 = tpu.matmul %40, %2, %cst_22 {dimension_numbers = #tpu.dot_dimension_numbers<[1], [0], [0], [1], [0, 0, 1, 1], [], []>} : vector<2x32xf32>, vector<32x16xf32>, vector<2x16xf32> -> vector<2x16xf32>
    %c0_23 = arith.constant 0 : index
    %c0_24 = arith.constant 0 : index
    %42 = vector.load %arg8[%c0_23, %c0_24] : memref<1x16xf32, #tpu.memory_space<vmem>>, vector<1x16xf32>
    %43 = vector.broadcast %42 : vector<1x16xf32> to vector<2x16xf32>
    %44 = arith.addf %41, %43 : vector<2x16xf32>
    %c0_25 = arith.constant 0 : index
    %c0_26 = arith.constant 0 : index
    %45 = vector.load %arg9[%c0_25, %c0_26] : memref<2x16xf32, #tpu.memory_space<vmem>>, vector<2x16xf32>
    tpu.vector_store %arg9[%c0_25, %c0_26], %44 {strides = array<i32>} : memref<2x16xf32, #tpu.memory_space<vmem>>, vector<2x16xf32>,
    %c0_27 = arith.constant 0 : index
    %c0_28 = arith.constant 0 : index
    %46 = vector.load %arg10[%c0_27, %c0_28] : memref<2x32xf32, #tpu.memory_space<vmem>>, vector<2x32xf32>
    tpu.vector_store %arg10[%c0_27, %c0_28], %40 {strides = array<i32>} : memref<2x32xf32, #tpu.memory_space<vmem>>, vector<2x32xf32>,
    %c0_29 = arith.constant 0 : index
    %c0_30 = arith.constant 0 : index
    %47 = vector.load %arg11[%c0_29, %c0_30] : memref<2x32xf32, #tpu.memory_space<vmem>>, vector<2x32xf32>
    tpu.vector_store %arg11[%c0_29, %c0_30], %38 {strides = array<i32>} : memref<2x32xf32, #tpu.memory_space<vmem>>, vector<2x32xf32>,
    %c1_i32 = arith.constant 1 : i32
    %c2_i32 = arith.constant 2 : i32
    %48 = arith.muli %c1_i32, %c2_i32 : i32
    %49 = arith.index_cast %48 : i32 to index
    %c0_31 = arith.constant 0 : index
    %50 = vector.load %arg12[%49, %c0_31] : memref<16x128xf32, #tpu.memory_space<vmem>>, vector<2x128xf32>
    %c0_32 = arith.constant 0 : index
    %c0_33 = arith.constant 0 : index
    %51 = vector.load %arg10[%c0_32, %c0_33] : memref<2x32xf32, #tpu.memory_space<vmem>>, vector<2x32xf32>
    %c0_34 = arith.constant 0 : index
    %c0_35 = arith.constant 0 : index
    %52 = vector.load %arg11[%c0_34, %c0_35] : memref<2x32xf32, #tpu.memory_space<vmem>>, vector<2x32xf32>
    %cst_36 = arith.constant dense<0.000000e+00> : vector<2x128xf32>
    %53 = tpu.matmul %51, %1, %cst_36 {dimension_numbers = #tpu.dot_dimension_numbers<[1], [0], [0], [1], [0, 0, 1, 1], [], []>} : vector<2x32xf32>, vector<32x128xf32>, vector<2x128xf32> -> vector<2x128xf32>
    %54 = arith.addf %53, %50 : vector<2x128xf32>
    %55 = vector.extract_strided_slice %54 {offsets = [0, 0], sizes = [2, 32], strides = [1, 1]} : vector<2x128xf32> to vector<2x32xf32>
    %56 = arith.negf %55 : vector<2x32xf32>
    %57 = math.exp %56 : vector<2x32xf32>
    %cst_37 = arith.constant 1.000000e+00 : f32
    %58 = vector.broadcast %cst_37 : f32 to vector<2x32xf32>
    %59 = arith.addf %58, %57 : vector<2x32xf32>
    %60 = arith.divf %58, %59 : vector<2x32xf32>
    %61 = vector.extract_strided_slice %54 {offsets = [0, 32], sizes = [2, 32], strides = [1, 1]} : vector<2x128xf32> to vector<2x32xf32>
    %62 = arith.negf %61 : vector<2x32xf32>
    %63 = math.exp %62 : vector<2x32xf32>
    %cst_38 = arith.constant 1.000000e+00 : f32
    %64 = vector.broadcast %cst_38 : f32 to vector<2x32xf32>
    %65 = arith.addf %64, %63 : vector<2x32xf32>
    %66 = arith.divf %64, %65 : vector<2x32xf32>
    %67 = vector.extract_strided_slice %54 {offsets = [0, 64], sizes = [2, 32], strides = [1, 1]} : vector<2x128xf32> to vector<2x32xf32>
    %68 = math.tanh %67 : vector<2x32xf32>
    %69 = vector.extract_strided_slice %54 {offsets = [0, 96], sizes = [2, 32], strides = [1, 1]} : vector<2x128xf32> to vector<2x32xf32>
    %70 = arith.negf %69 : vector<2x32xf32>
    %71 = math.exp %70 : vector<2x32xf32>
    %cst_39 = arith.constant 1.000000e+00 : f32
    %72 = vector.broadcast %cst_39 : f32 to vector<2x32xf32>
    %73 = arith.addf %72, %71 : vector<2x32xf32>
    %74 = arith.divf %72, %73 : vector<2x32xf32>
    %75 = arith.mulf %66, %52 : vector<2x32xf32>
    %76 = arith.mulf %60, %68 : vector<2x32xf32>
    %77 = arith.addf %75, %76 : vector<2x32xf32>
    %78 = math.tanh %77 : vector<2x32xf32>
    %79 = arith.mulf %74, %78 : vector<2x32xf32>
    %c0_40 = arith.constant 0 : index
    %c0_41 = arith.constant 0 : index
    %80 = vector.load %arg10[%c0_40, %c0_41] : memref<2x32xf32, #tpu.memory_space<vmem>>, vector<2x32xf32>
    tpu.vector_store %arg10[%c0_40, %c0_41], %79 {strides = array<i32>} : memref<2x32xf32, #tpu.memory_space<vmem>>, vector<2x32xf32>,
    %c0_42 = arith.constant 0 : index
    %c0_43 = arith.constant 0 : index
    %81 = vector.load %arg11[%c0_42, %c0_43] : memref<2x32xf32, #tpu.memory_space<vmem>>, vector<2x32xf32>
    tpu.vector_store %arg11[%c0_42, %c0_43], %77 {strides = array<i32>} : memref<2x32xf32, #tpu.memory_space<vmem>>, vector<2x32xf32>,
    %c2_i32_44 = arith.constant 2 : i32
    %c2_i32_45 = arith.constant 2 : i32
    %82 = arith.muli %c2_i32_44, %c2_i32_45 : i32
    %83 = arith.index_cast %82 : i32 to index
    %c0_46 = arith.constant 0 : index
    %84 = vector.load %arg12[%83, %c0_46] : memref<16x128xf32, #tpu.memory_space<vmem>>, vector<2x128xf32>
    %c0_47 = arith.constant 0 : index
    %c0_48 = arith.constant 0 : index
    %85 = vector.load %arg10[%c0_47, %c0_48] : memref<2x32xf32, #tpu.memory_space<vmem>>, vector<2x32xf32>
    %c0_49 = arith.constant 0 : index
    %c0_50 = arith.constant 0 : index
    %86 = vector.load %arg11[%c0_49, %c0_50] : memref<2x32xf32, #tpu.memory_space<vmem>>, vector<2x32xf32>
    %cst_51 = arith.constant dense<0.000000e+00> : vector<2x128xf32>
    %87 = tpu.matmul %85, %1, %cst_51 {dimension_numbers = #tpu.dot_dimension_numbers<[1], [0], [0], [1], [0, 0, 1, 1], [], []>} : vector<2x32xf32>, vector<32x128xf32>, vector<2x128xf32> -> vector<2x128xf32>
    %88 = arith.addf %87, %84 : vector<2x128xf32>
    %89 = vector.extract_strided_slice %88 {offsets = [0, 0], sizes = [2, 32], strides = [1, 1]} : vector<2x128xf32> to vector<2x32xf32>
    %90 = arith.negf %89 : vector<2x32xf32>
    %91 = math.exp %90 : vector<2x32xf32>
    %cst_52 = arith.constant 1.000000e+00 : f32
    %92 = vector.broadcast %cst_52 : f32 to vector<2x32xf32>
    %93 = arith.addf %92, %91 : vector<2x32xf32>
    %94 = arith.divf %92, %93 : vector<2x32xf32>
    %95 = vector.extract_strided_slice %88 {offsets = [0, 32], sizes = [2, 32], strides = [1, 1]} : vector<2x128xf32> to vector<2x32xf32>
    %96 = arith.negf %95 : vector<2x32xf32>
    %97 = math.exp %96 : vector<2x32xf32>
    %cst_53 = arith.constant 1.000000e+00 : f32
    %98 = vector.broadcast %cst_53 : f32 to vector<2x32xf32>
    %99 = arith.addf %98, %97 : vector<2x32xf32>
    %100 = arith.divf %98, %99 : vector<2x32xf32>
    %101 = vector.extract_strided_slice %88 {offsets = [0, 64], sizes = [2, 32], strides = [1, 1]} : vector<2x128xf32> to vector<2x32xf32>
    %102 = math.tanh %101 : vector<2x32xf32>
    %103 = vector.extract_strided_slice %88 {offsets = [0, 96], sizes = [2, 32], strides = [1, 1]} : vector<2x128xf32> to vector<2x32xf32>
    %104 = arith.negf %103 : vector<2x32xf32>
    %105 = math.exp %104 : vector<2x32xf32>
    %cst_54 = arith.constant 1.000000e+00 : f32
    %106 = vector.broadcast %cst_54 : f32 to vector<2x32xf32>
    %107 = arith.addf %106, %105 : vector<2x32xf32>
    %108 = arith.divf %106, %107 : vector<2x32xf32>
    %109 = arith.mulf %100, %86 : vector<2x32xf32>
    %110 = arith.mulf %94, %102 : vector<2x32xf32>
    %111 = arith.addf %109, %110 : vector<2x32xf32>
    %112 = math.tanh %111 : vector<2x32xf32>
    %113 = arith.mulf %108, %112 : vector<2x32xf32>
    %c0_55 = arith.constant 0 : index
    %c0_56 = arith.constant 0 : index
    %114 = vector.load %arg10[%c0_55, %c0_56] : memref<2x32xf32, #tpu.memory_space<vmem>>, vector<2x32xf32>
    tpu.vector_store %arg10[%c0_55, %c0_56], %113 {strides = array<i32>} : memref<2x32xf32, #tpu.memory_space<vmem>>, vector<2x32xf32>,
    %c0_57 = arith.constant 0 : index
    %c0_58 = arith.constant 0 : index
    %115 = vector.load %arg11[%c0_57, %c0_58] : memref<2x32xf32, #tpu.memory_space<vmem>>, vector<2x32xf32>
    tpu.vector_store %arg11[%c0_57, %c0_58], %111 {strides = array<i32>} : memref<2x32xf32, #tpu.memory_space<vmem>>, vector<2x32xf32>,
    %c3_i32 = arith.constant 3 : i32
    %c2_i32_59 = arith.constant 2 : i32
    %116 = arith.muli %c3_i32, %c2_i32_59 : i32
    %117 = arith.index_cast %116 : i32 to index
    %c0_60 = arith.constant 0 : index
    %118 = vector.load %arg12[%117, %c0_60] : memref<16x128xf32, #tpu.memory_space<vmem>>, vector<2x128xf32>
    %c0_61 = arith.constant 0 : index
    %c0_62 = arith.constant 0 : index
    %119 = vector.load %arg10[%c0_61, %c0_62] : memref<2x32xf32, #tpu.memory_space<vmem>>, vector<2x32xf32>
    %c0_63 = arith.constant 0 : index
    %c0_64 = arith.constant 0 : index
    %120 = vector.load %arg11[%c0_63, %c0_64] : memref<2x32xf32, #tpu.memory_space<vmem>>, vector<2x32xf32>
    %cst_65 = arith.constant dense<0.000000e+00> : vector<2x128xf32>
    %121 = tpu.matmul %119, %1, %cst_65 {dimension_numbers = #tpu.dot_dimension_numbers<[1], [0], [0], [1], [0, 0, 1, 1], [], []>} : vector<2x32xf32>, vector<32x128xf32>, vector<2x128xf32> -> vector<2x128xf32>
    %122 = arith.addf %121, %118 : vector<2x128xf32>
    %123 = vector.extract_strided_slice %122 {offsets = [0, 0], sizes = [2, 32], strides = [1, 1]} : vector<2x128xf32> to vector<2x32xf32>
    %124 = arith.negf %123 : vector<2x32xf32>
    %125 = math.exp %124 : vector<2x32xf32>
    %cst_66 = arith.constant 1.000000e+00 : f32
    %126 = vector.broadcast %cst_66 : f32 to vector<2x32xf32>
    %127 = arith.addf %126, %125 : vector<2x32xf32>
    %128 = arith.divf %126, %127 : vector<2x32xf32>
    %129 = vector.extract_strided_slice %122 {offsets = [0, 32], sizes = [2, 32], strides = [1, 1]} : vector<2x128xf32> to vector<2x32xf32>
    %130 = arith.negf %129 : vector<2x32xf32>
    %131 = math.exp %130 : vector<2x32xf32>
    %cst_67 = arith.constant 1.000000e+00 : f32
    %132 = vector.broadcast %cst_67 : f32 to vector<2x32xf32>
    %133 = arith.addf %132, %131 : vector<2x32xf32>
    %134 = arith.divf %132, %133 : vector<2x32xf32>
    %135 = vector.extract_strided_slice %122 {offsets = [0, 64], sizes = [2, 32], strides = [1, 1]} : vector<2x128xf32> to vector<2x32xf32>
    %136 = math.tanh %135 : vector<2x32xf32>
    %137 = vector.extract_strided_slice %122 {offsets = [0, 96], sizes = [2, 32], strides = [1, 1]} : vector<2x128xf32> to vector<2x32xf32>
    %138 = arith.negf %137 : vector<2x32xf32>
    %139 = math.exp %138 : vector<2x32xf32>
    %cst_68 = arith.constant 1.000000e+00 : f32
    %140 = vector.broadcast %cst_68 : f32 to vector<2x32xf32>
    %141 = arith.addf %140, %139 : vector<2x32xf32>
    %142 = arith.divf %140, %141 : vector<2x32xf32>
    %143 = arith.mulf %134, %120 : vector<2x32xf32>
    %144 = arith.mulf %128, %136 : vector<2x32xf32>
    %145 = arith.addf %143, %144 : vector<2x32xf32>
    %146 = math.tanh %145 : vector<2x32xf32>
    %147 = arith.mulf %142, %146 : vector<2x32xf32>
    %c0_69 = arith.constant 0 : index
    %c0_70 = arith.constant 0 : index
    %148 = vector.load %arg10[%c0_69, %c0_70] : memref<2x32xf32, #tpu.memory_space<vmem>>, vector<2x32xf32>
    tpu.vector_store %arg10[%c0_69, %c0_70], %147 {strides = array<i32>} : memref<2x32xf32, #tpu.memory_space<vmem>>, vector<2x32xf32>,
    %c0_71 = arith.constant 0 : index
    %c0_72 = arith.constant 0 : index
    %149 = vector.load %arg11[%c0_71, %c0_72] : memref<2x32xf32, #tpu.memory_space<vmem>>, vector<2x32xf32>
    tpu.vector_store %arg11[%c0_71, %c0_72], %145 {strides = array<i32>} : memref<2x32xf32, #tpu.memory_space<vmem>>, vector<2x32xf32>,
    %c4_i32 = arith.constant 4 : i32
    %c2_i32_73 = arith.constant 2 : i32
    %150 = arith.muli %c4_i32, %c2_i32_73 : i32
    %151 = arith.index_cast %150 : i32 to index
    %c0_74 = arith.constant 0 : index
    %152 = vector.load %arg12[%151, %c0_74] : memref<16x128xf32, #tpu.memory_space<vmem>>, vector<2x128xf32>
    %c0_75 = arith.constant 0 : index
    %c0_76 = arith.constant 0 : index
    %153 = vector.load %arg10[%c0_75, %c0_76] : memref<2x32xf32, #tpu.memory_space<vmem>>, vector<2x32xf32>
    %c0_77 = arith.constant 0 : index
    %c0_78 = arith.constant 0 : index
    %154 = vector.load %arg11[%c0_77, %c0_78] : memref<2x32xf32, #tpu.memory_space<vmem>>, vector<2x32xf32>
    %cst_79 = arith.constant dense<0.000000e+00> : vector<2x128xf32>
    %155 = tpu.matmul %153, %1, %cst_79 {dimension_numbers = #tpu.dot_dimension_numbers<[1], [0], [0], [1], [0, 0, 1, 1], [], []>} : vector<2x32xf32>, vector<32x128xf32>, vector<2x128xf32> -> vector<2x128xf32>
    %156 = arith.addf %155, %152 : vector<2x128xf32>
    %157 = vector.extract_strided_slice %156 {offsets = [0, 0], sizes = [2, 32], strides = [1, 1]} : vector<2x128xf32> to vector<2x32xf32>
    %158 = arith.negf %157 : vector<2x32xf32>
    %159 = math.exp %158 : vector<2x32xf32>
    %cst_80 = arith.constant 1.000000e+00 : f32
    %160 = vector.broadcast %cst_80 : f32 to vector<2x32xf32>
    %161 = arith.addf %160, %159 : vector<2x32xf32>
    %162 = arith.divf %160, %161 : vector<2x32xf32>
    %163 = vector.extract_strided_slice %156 {offsets = [0, 32], sizes = [2, 32], strides = [1, 1]} : vector<2x128xf32> to vector<2x32xf32>
    %164 = arith.negf %163 : vector<2x32xf32>
    %165 = math.exp %164 : vector<2x32xf32>
    %cst_81 = arith.constant 1.000000e+00 : f32
    %166 = vector.broadcast %cst_81 : f32 to vector<2x32xf32>
    %167 = arith.addf %166, %165 : vector<2x32xf32>
    %168 = arith.divf %166, %167 : vector<2x32xf32>
    %169 = vector.extract_strided_slice %156 {offsets = [0, 64], sizes = [2, 32], strides = [1, 1]} : vector<2x128xf32> to vector<2x32xf32>
    %170 = math.tanh %169 : vector<2x32xf32>
    %171 = vector.extract_strided_slice %156 {offsets = [0, 96], sizes = [2, 32], strides = [1, 1]} : vector<2x128xf32> to vector<2x32xf32>
    %172 = arith.negf %171 : vector<2x32xf32>
    %173 = math.exp %172 : vector<2x32xf32>
    %cst_82 = arith.constant 1.000000e+00 : f32
    %174 = vector.broadcast %cst_82 : f32 to vector<2x32xf32>
    %175 = arith.addf %174, %173 : vector<2x32xf32>
    %176 = arith.divf %174, %175 : vector<2x32xf32>
    %177 = arith.mulf %168, %154 : vector<2x32xf32>
    %178 = arith.mulf %162, %170 : vector<2x32xf32>
    %179 = arith.addf %177, %178 : vector<2x32xf32>
    %180 = math.tanh %179 : vector<2x32xf32>
    %181 = arith.mulf %176, %180 : vector<2x32xf32>
    %c0_83 = arith.constant 0 : index
    %c0_84 = arith.constant 0 : index
    %182 = vector.load %arg10[%c0_83, %c0_84] : memref<2x32xf32, #tpu.memory_space<vmem>>, vector<2x32xf32>
    tpu.vector_store %arg10[%c0_83, %c0_84], %181 {strides = array<i32>} : memref<2x32xf32, #tpu.memory_space<vmem>>, vector<2x32xf32>,
    %c0_85 = arith.constant 0 : index
    %c0_86 = arith.constant 0 : index
    %183 = vector.load %arg11[%c0_85, %c0_86] : memref<2x32xf32, #tpu.memory_space<vmem>>, vector<2x32xf32>
    tpu.vector_store %arg11[%c0_85, %c0_86], %179 {strides = array<i32>} : memref<2x32xf32, #tpu.memory_space<vmem>>, vector<2x32xf32>,
    %c5_i32 = arith.constant 5 : i32
    %c2_i32_87 = arith.constant 2 : i32
    %184 = arith.muli %c5_i32, %c2_i32_87 : i32
    %185 = arith.index_cast %184 : i32 to index
    %c0_88 = arith.constant 0 : index
    %186 = vector.load %arg12[%185, %c0_88] : memref<16x128xf32, #tpu.memory_space<vmem>>, vector<2x128xf32>
    %c0_89 = arith.constant 0 : index
    %c0_90 = arith.constant 0 : index
    %187 = vector.load %arg10[%c0_89, %c0_90] : memref<2x32xf32, #tpu.memory_space<vmem>>, vector<2x32xf32>
    %c0_91 = arith.constant 0 : index
    %c0_92 = arith.constant 0 : index
    %188 = vector.load %arg11[%c0_91, %c0_92] : memref<2x32xf32, #tpu.memory_space<vmem>>, vector<2x32xf32>
    %cst_93 = arith.constant dense<0.000000e+00> : vector<2x128xf32>
    %189 = tpu.matmul %187, %1, %cst_93 {dimension_numbers = #tpu.dot_dimension_numbers<[1], [0], [0], [1], [0, 0, 1, 1], [], []>} : vector<2x32xf32>, vector<32x128xf32>, vector<2x128xf32> -> vector<2x128xf32>
    %190 = arith.addf %189, %186 : vector<2x128xf32>
    %191 = vector.extract_strided_slice %190 {offsets = [0, 0], sizes = [2, 32], strides = [1, 1]} : vector<2x128xf32> to vector<2x32xf32>
    %192 = arith.negf %191 : vector<2x32xf32>
    %193 = math.exp %192 : vector<2x32xf32>
    %cst_94 = arith.constant 1.000000e+00 : f32
    %194 = vector.broadcast %cst_94 : f32 to vector<2x32xf32>
    %195 = arith.addf %194, %193 : vector<2x32xf32>
    %196 = arith.divf %194, %195 : vector<2x32xf32>
    %197 = vector.extract_strided_slice %190 {offsets = [0, 32], sizes = [2, 32], strides = [1, 1]} : vector<2x128xf32> to vector<2x32xf32>
    %198 = arith.negf %197 : vector<2x32xf32>
    %199 = math.exp %198 : vector<2x32xf32>
    %cst_95 = arith.constant 1.000000e+00 : f32
    %200 = vector.broadcast %cst_95 : f32 to vector<2x32xf32>
    %201 = arith.addf %200, %199 : vector<2x32xf32>
    %202 = arith.divf %200, %201 : vector<2x32xf32>
    %203 = vector.extract_strided_slice %190 {offsets = [0, 64], sizes = [2, 32], strides = [1, 1]} : vector<2x128xf32> to vector<2x32xf32>
    %204 = math.tanh %203 : vector<2x32xf32>
    %205 = vector.extract_strided_slice %190 {offsets = [0, 96], sizes = [2, 32], strides = [1, 1]} : vector<2x128xf32> to vector<2x32xf32>
    %206 = arith.negf %205 : vector<2x32xf32>
    %207 = math.exp %206 : vector<2x32xf32>
    %cst_96 = arith.constant 1.000000e+00 : f32
    %208 = vector.broadcast %cst_96 : f32 to vector<2x32xf32>
    %209 = arith.addf %208, %207 : vector<2x32xf32>
    %210 = arith.divf %208, %209 : vector<2x32xf32>
    %211 = arith.mulf %202, %188 : vector<2x32xf32>
    %212 = arith.mulf %196, %204 : vector<2x32xf32>
    %213 = arith.addf %211, %212 : vector<2x32xf32>
    %214 = math.tanh %213 : vector<2x32xf32>
    %215 = arith.mulf %210, %214 : vector<2x32xf32>
    %c0_97 = arith.constant 0 : index
    %c0_98 = arith.constant 0 : index
    %216 = vector.load %arg10[%c0_97, %c0_98] : memref<2x32xf32, #tpu.memory_space<vmem>>, vector<2x32xf32>
    tpu.vector_store %arg10[%c0_97, %c0_98], %215 {strides = array<i32>} : memref<2x32xf32, #tpu.memory_space<vmem>>, vector<2x32xf32>,
    %c0_99 = arith.constant 0 : index
    %c0_100 = arith.constant 0 : index
    %217 = vector.load %arg11[%c0_99, %c0_100] : memref<2x32xf32, #tpu.memory_space<vmem>>, vector<2x32xf32>
    tpu.vector_store %arg11[%c0_99, %c0_100], %213 {strides = array<i32>} : memref<2x32xf32, #tpu.memory_space<vmem>>, vector<2x32xf32>,
    %c6_i32 = arith.constant 6 : i32
    %c2_i32_101 = arith.constant 2 : i32
    %218 = arith.muli %c6_i32, %c2_i32_101 : i32
    %219 = arith.index_cast %218 : i32 to index
    %c0_102 = arith.constant 0 : index
    %220 = vector.load %arg12[%219, %c0_102] : memref<16x128xf32, #tpu.memory_space<vmem>>, vector<2x128xf32>
    %c0_103 = arith.constant 0 : index
    %c0_104 = arith.constant 0 : index
    %221 = vector.load %arg10[%c0_103, %c0_104] : memref<2x32xf32, #tpu.memory_space<vmem>>, vector<2x32xf32>
    %c0_105 = arith.constant 0 : index
    %c0_106 = arith.constant 0 : index
    %222 = vector.load %arg11[%c0_105, %c0_106] : memref<2x32xf32, #tpu.memory_space<vmem>>, vector<2x32xf32>
    %cst_107 = arith.constant dense<0.000000e+00> : vector<2x128xf32>
    %223 = tpu.matmul %221, %1, %cst_107 {dimension_numbers = #tpu.dot_dimension_numbers<[1], [0], [0], [1], [0, 0, 1, 1], [], []>} : vector<2x32xf32>, vector<32x128xf32>, vector<2x128xf32> -> vector<2x128xf32>
    %224 = arith.addf %223, %220 : vector<2x128xf32>
    %225 = vector.extract_strided_slice %224 {offsets = [0, 0], sizes = [2, 32], strides = [1, 1]} : vector<2x128xf32> to vector<2x32xf32>
    %226 = arith.negf %225 : vector<2x32xf32>
    %227 = math.exp %226 : vector<2x32xf32>
    %cst_108 = arith.constant 1.000000e+00 : f32
    %228 = vector.broadcast %cst_108 : f32 to vector<2x32xf32>
    %229 = arith.addf %228, %227 : vector<2x32xf32>
    %230 = arith.divf %228, %229 : vector<2x32xf32>
    %231 = vector.extract_strided_slice %224 {offsets = [0, 32], sizes = [2, 32], strides = [1, 1]} : vector<2x128xf32> to vector<2x32xf32>
    %232 = arith.negf %231 : vector<2x32xf32>
    %233 = math.exp %232 : vector<2x32xf32>
    %cst_109 = arith.constant 1.000000e+00 : f32
    %234 = vector.broadcast %cst_109 : f32 to vector<2x32xf32>
    %235 = arith.addf %234, %233 : vector<2x32xf32>
    %236 = arith.divf %234, %235 : vector<2x32xf32>
    %237 = vector.extract_strided_slice %224 {offsets = [0, 64], sizes = [2, 32], strides = [1, 1]} : vector<2x128xf32> to vector<2x32xf32>
    %238 = math.tanh %237 : vector<2x32xf32>
    %239 = vector.extract_strided_slice %224 {offsets = [0, 96], sizes = [2, 32], strides = [1, 1]} : vector<2x128xf32> to vector<2x32xf32>
    %240 = arith.negf %239 : vector<2x32xf32>
    %241 = math.exp %240 : vector<2x32xf32>
    %cst_110 = arith.constant 1.000000e+00 : f32
    %242 = vector.broadcast %cst_110 : f32 to vector<2x32xf32>
    %243 = arith.addf %242, %241 : vector<2x32xf32>
    %244 = arith.divf %242, %243 : vector<2x32xf32>
    %245 = arith.mulf %236, %222 : vector<2x32xf32>
    %246 = arith.mulf %230, %238 : vector<2x32xf32>
    %247 = arith.addf %245, %246 : vector<2x32xf32>
    %248 = math.tanh %247 : vector<2x32xf32>
    %249 = arith.mulf %244, %248 : vector<2x32xf32>
    %c0_111 = arith.constant 0 : index
    %c0_112 = arith.constant 0 : index
    %250 = vector.load %arg10[%c0_111, %c0_112] : memref<2x32xf32, #tpu.memory_space<vmem>>, vector<2x32xf32>
    tpu.vector_store %arg10[%c0_111, %c0_112], %249 {strides = array<i32>} : memref<2x32xf32, #tpu.memory_space<vmem>>, vector<2x32xf32>,
    %c0_113 = arith.constant 0 : index
    %c0_114 = arith.constant 0 : index
    %251 = vector.load %arg11[%c0_113, %c0_114] : memref<2x32xf32, #tpu.memory_space<vmem>>, vector<2x32xf32>
    tpu.vector_store %arg11[%c0_113, %c0_114], %247 {strides = array<i32>} : memref<2x32xf32, #tpu.memory_space<vmem>>, vector<2x32xf32>,
    %c7_i32 = arith.constant 7 : i32
    %c2_i32_115 = arith.constant 2 : i32
    %252 = arith.muli %c7_i32, %c2_i32_115 : i32
    %253 = arith.index_cast %252 : i32 to index
    %c0_116 = arith.constant 0 : index
    %254 = vector.load %arg12[%253, %c0_116] : memref<16x128xf32, #tpu.memory_space<vmem>>, vector<2x128xf32>
    %c0_117 = arith.constant 0 : index
    %c0_118 = arith.constant 0 : index
    %255 = vector.load %arg10[%c0_117, %c0_118] : memref<2x32xf32, #tpu.memory_space<vmem>>, vector<2x32xf32>
    %c0_119 = arith.constant 0 : index
    %c0_120 = arith.constant 0 : index
    %256 = vector.load %arg11[%c0_119, %c0_120] : memref<2x32xf32, #tpu.memory_space<vmem>>, vector<2x32xf32>
    %cst_121 = arith.constant dense<0.000000e+00> : vector<2x128xf32>
    %257 = tpu.matmul %255, %1, %cst_121 {dimension_numbers = #tpu.dot_dimension_numbers<[1], [0], [0], [1], [0, 0, 1, 1], [], []>} : vector<2x32xf32>, vector<32x128xf32>, vector<2x128xf32> -> vector<2x128xf32>
    %258 = arith.addf %257, %254 : vector<2x128xf32>
    %259 = vector.extract_strided_slice %258 {offsets = [0, 0], sizes = [2, 32], strides = [1, 1]} : vector<2x128xf32> to vector<2x32xf32>
    %260 = arith.negf %259 : vector<2x32xf32>
    %261 = math.exp %260 : vector<2x32xf32>
    %cst_122 = arith.constant 1.000000e+00 : f32
    %262 = vector.broadcast %cst_122 : f32 to vector<2x32xf32>
    %263 = arith.addf %262, %261 : vector<2x32xf32>
    %264 = arith.divf %262, %263 : vector<2x32xf32>
    %265 = vector.extract_strided_slice %258 {offsets = [0, 32], sizes = [2, 32], strides = [1, 1]} : vector<2x128xf32> to vector<2x32xf32>
    %266 = arith.negf %265 : vector<2x32xf32>
    %267 = math.exp %266 : vector<2x32xf32>
    %cst_123 = arith.constant 1.000000e+00 : f32
    %268 = vector.broadcast %cst_123 : f32 to vector<2x32xf32>
    %269 = arith.addf %268, %267 : vector<2x32xf32>
    %270 = arith.divf %268, %269 : vector<2x32xf32>
    %271 = vector.extract_strided_slice %258 {offsets = [0, 64], sizes = [2, 32], strides = [1, 1]} : vector<2x128xf32> to vector<2x32xf32>
    %272 = math.tanh %271 : vector<2x32xf32>
    %273 = vector.extract_strided_slice %258 {offsets = [0, 96], sizes = [2, 32], strides = [1, 1]} : vector<2x128xf32> to vector<2x32xf32>
    %274 = arith.negf %273 : vector<2x32xf32>
    %275 = math.exp %274 : vector<2x32xf32>
    %cst_124 = arith.constant 1.000000e+00 : f32
    %276 = vector.broadcast %cst_124 : f32 to vector<2x32xf32>
    %277 = arith.addf %276, %275 : vector<2x32xf32>
    %278 = arith.divf %276, %277 : vector<2x32xf32>
    %279 = arith.mulf %270, %256 : vector<2x32xf32>
    %280 = arith.mulf %264, %272 : vector<2x32xf32>
    %281 = arith.addf %279, %280 : vector<2x32xf32>
    %282 = math.tanh %281 : vector<2x32xf32>
    %283 = arith.mulf %278, %282 : vector<2x32xf32>
    %c0_125 = arith.constant 0 : index
    %c0_126 = arith.constant 0 : index
    %284 = vector.load %arg10[%c0_125, %c0_126] : memref<2x32xf32, #tpu.memory_space<vmem>>, vector<2x32xf32>
    tpu.vector_store %arg10[%c0_125, %c0_126], %283 {strides = array<i32>} : memref<2x32xf32, #tpu.memory_space<vmem>>, vector<2x32xf32>,
    %c0_127 = arith.constant 0 : index
    %c0_128 = arith.constant 0 : index
    %285 = vector.load %arg11[%c0_127, %c0_128] : memref<2x32xf32, #tpu.memory_space<vmem>>, vector<2x32xf32>
    tpu.vector_store %arg11[%c0_127, %c0_128], %281 {strides = array<i32>} : memref<2x32xf32, #tpu.memory_space<vmem>>, vector<2x32xf32>,
    %c7_i32_129 = arith.constant 7 : i32
    return
  }
  func.func @transform_0(%arg0: i32) -> (i32, i32) {
    %c0_i32 = arith.constant 0 : i32
    %c0_i32_0 = arith.constant 0 : i32
    %c0_i32_1 = arith.constant 0 : i32
    return %c0_i32, %c0_i32_0 : i32, i32
  }
  func.func @transform_1(%arg0: i32) -> (i32, i32) {
    %c0_i32 = arith.constant 0 : i32
    %c0_i32_0 = arith.constant 0 : i32
    %c0_i32_1 = arith.constant 0 : i32
    return %c0_i32, %c0_i32_0 : i32, i32
  }
  func.func @transform_2(%arg0: i32) -> (i32, i32) {
    %c0_i32 = arith.constant 0 : i32
    %c0_i32_0 = arith.constant 0 : i32
    %c0_i32_1 = arith.constant 0 : i32
    return %c0_i32, %c0_i32_0 : i32, i32
  }
  func.func @transform_3(%arg0: i32) -> (i32, i32) {
    %c0_i32 = arith.constant 0 : i32
    %c0_i32_0 = arith.constant 0 : i32
    %c0_i32_1 = arith.constant 0 : i32
    return %c0_i32, %c0_i32_0 : i32, i32
  }
  func.func @transform_4(%arg0: i32) -> (i32, i32) {
    %c0_i32 = arith.constant 0 : i32
    %c0_i32_0 = arith.constant 0 : i32
    %c0_i32_1 = arith.constant 0 : i32
    return %c0_i32, %c0_i32_0 : i32, i32
  }
  func.func @transform_5(%arg0: i32) -> (i32, i32) {
    %c0_i32 = arith.constant 0 : i32
    %c0_i32_0 = arith.constant 0 : i32
    %c0_i32_1 = arith.constant 0 : i32
    return %c0_i32, %c0_i32_0 : i32, i32
  }
  func.func @transform_6(%arg0: i32) -> (i32, i32) {
    %c0_i32 = arith.constant 0 : i32
    %c0_i32_0 = arith.constant 0 : i32
    %c0_i32_1 = arith.constant 0 : i32
    return %c0_i32, %c0_i32_0 : i32, i32
  }
  func.func @transform_7(%arg0: i32) -> (i32, i32) {
    %c0_i32 = arith.constant 0 : i32
    %c0_i32_0 = arith.constant 0 : i32
    %c0_i32_1 = arith.constant 0 : i32
    return %c0_i32, %c0_i32_0 : i32, i32
  }
  func.func @transform_8(%arg0: i32) -> (i32, i32) {
    %c0_i32 = arith.constant 0 : i32
    %c0_i32_0 = arith.constant 0 : i32
    %c0_i32_1 = arith.constant 0 : i32
    return %c0_i32, %c0_i32_0 : i32, i32
  }
  func.func @transform_9(%arg0: i32) -> (i32, i32) {
    %c0_i32 = arith.constant 0 : i32
    %c0_i32_0 = arith.constant 0 : i32
    %c0_i32_1 = arith.constant 0 : i32
    return %c0_i32, %c0_i32_0 : i32, i32
  }
  func.func @transform_10(%arg0: i32) -> (i32, i32) {
    %c0_i32 = arith.constant 0 : i32
    %c0_i32_0 = arith.constant 0 : i32
    %c0_i32_1 = arith.constant 0 : i32
    return %c0_i32, %c0_i32_0 : i32, i32
  }
}

</mosaic_0001>

<llo_original>
// kernel: tpu_custom_call.1
$region0: #{tpu_custom_call.1}
  #allocation0 [shape = 'u32[]', space=smem, size = 0x4, offset = 0x4, fixed_abs, tag = 'smem constant byte address 0x4 - core index']
  #allocation1 [shape = 'u32[144,128]{1,0:T(1,128)}', space=vmem, size = 0x12000, scoped, tag = 'internal scratch']
  #allocation2 [shape = 'f32[16,128]{1,0:T(8,128)}', space=vmem, size = 0x2000, scoped, tag = 'scratch operand']
  %s0 = inlined_call_operand.vmem [shape: f32[16,16], index: 0, kind: input, shape index: {}]
  %s1 = inlined_call_operand.vmem [shape: f32[2,32], index: 1, kind: input, shape index: {}]
  %s2 = inlined_call_operand.vmem [shape: f32[2,32], index: 2, kind: input, shape index: {}]
  %s3 = inlined_call_operand.hbm [shape: f32[16,128], index: 3, kind: input, shape index: {}]
  %s4 = inlined_call_operand.vmem [shape: f32[32,128], index: 4, kind: input, shape index: {}]
  %s5 = inlined_call_operand.vmem [shape: f32[1,128], index: 5, kind: input, shape index: {}]
  %s6 = inlined_call_operand.vmem [shape: f32[32,16], index: 6, kind: input, shape index: {}]
  %s7 = inlined_call_operand.vmem [shape: f32[1,16], index: 7, kind: input, shape index: {}]
  %s8 = inlined_call_operand.hbm [shape: f32[2,16], index: 8, kind: output, shape index: {0}]
  %s9 = inlined_call_operand.hbm [shape: f32[2,32], index: 9, kind: output, shape index: {1}]
  %s10 = inlined_call_operand.hbm [shape: f32[2,32], index: 10, kind: output, shape index: {2}]
  %11 = xla_tuple %s8, %s9, %s10
  %s12 = sld [smem:[#allocation0]]
  $region62: #{tpu_custom_call.1} parent=0
    _
  %s14 = ssub.s32 1, %s12
  %s15 = scalar_select 0, %s14, %s12
  $region1: #{tpu_custom_call.1} parent=0
    #allocation3 [shape = 'u8[8192]{0}', space=vmem, size = 0x2000, scoped, tag = 'input window, operand 3, single buffered']
    #allocation4 [shape = 's32[1]{0}', space=sflag, size = 0x4, scoped, tag = 'scoped memory for tpu_custom_call.1']
    #allocation5 [shape = 's32[1]{0}', space=sflag, size = 0x4, scoped, tag = 'scoped memory for tpu_custom_call.1']
    #allocation6 [shape = 'u8[1024]{0}', space=vmem, size = 0x400, scoped, tag = 'output window, operand 0, single buffered']
    #allocation7 [shape = 'u8[1024]{0}', space=vmem, size = 0x400, scoped, tag = 'output window, operand 1, single buffered']
    #allocation8 [shape = 's32[1]{0}', space=sflag, size = 0x4, scoped, tag = 'scoped memory for tpu_custom_call.1']
    #allocation9 [shape = 'u8[1024]{0}', space=vmem, size = 0x400, scoped, tag = 'output window, operand 2, single buffered']
    %16 = vsyncpa [#allocation4], 0
    %17 = vsyncpa [#allocation5], 0
    %18 = vsyncpa [#allocation8], 0
    // Predicated region
    $region2: #{tpu_custom_call.1} parent=1 // pred_check
      _
    $region3: #{tpu_custom_call.1} parent=1 // pred_check_branch
      %20 = sbr.rel (0) target = $region5
    $region4: #{tpu_custom_call.1} parent=1 // pred_region
      _
    $region5: #{tpu_custom_call.1} parent=1 // pred_fallthru
      _
    // Predicated region
    $region6: #{tpu_custom_call.1} parent=1 // pred_check
      _
    $region7: #{tpu_custom_call.1} parent=1 // pred_check_branch
      %22 = sbr.rel (0) target = $region9
    $region8: #{tpu_custom_call.1} parent=1 // pred_region
      _
    $region9: #{tpu_custom_call.1} parent=1 // pred_fallthru
      _
    // Predicated region
    $region10: #{tpu_custom_call.1} parent=1 // pred_check
      _
    $region11: #{tpu_custom_call.1} parent=1 // pred_check_branch
      %24 = sbr.rel (0) target = $region13
    $region12: #{tpu_custom_call.1} parent=1 // pred_region
      _
    $region13: #{tpu_custom_call.1} parent=1 // pred_fallthru
      _
    // Predicated region
    $region14: #{tpu_custom_call.1} parent=1 // pred_check
      _
    $region15: #{tpu_custom_call.1} parent=1 // pred_check_branch
      %26 = sbr.rel (0) target = $region17
    $region16: #{tpu_custom_call.1} parent=1 // pred_region
      %s28 = ssub.s32 256, 256
      %29 = vsyncadd [#allocation4], %s28
      %s30 = sshll.u32 [#allocation3], 4
      %s31 = int_to_ptr.vmem [resolvable:$true] %s30
      %36 = dma.hbm_to_vmem [thread:$0]  %s3, 256, %s31, [#allocation4], 128, 128, 8
    $region17: #{tpu_custom_call.1} parent=1 // pred_fallthru
      _
    // Predicated region
    $region18: #{tpu_custom_call.1} parent=1 // pred_check
      _
    $region19: #{tpu_custom_call.1} parent=1 // pred_check_branch
      %38 = sbr.rel (0) target = $region21
    $region20: #{tpu_custom_call.1} parent=1 // pred_region
      _
    $region21: #{tpu_custom_call.1} parent=1 // pred_fallthru
      _
    // Predicated region
    $region22: #{tpu_custom_call.1} parent=1 // pred_check
      _
    $region23: #{tpu_custom_call.1} parent=1 // pred_check_branch
      %40 = sbr.rel (0) target = $region25
    $region24: #{tpu_custom_call.1} parent=1 // pred_region
      _
    $region25: #{tpu_custom_call.1} parent=1 // pred_fallthru
      _
    // Predicated region
    $region26: #{tpu_custom_call.1} parent=1 // pred_check
      _
    $region27: #{tpu_custom_call.1} parent=1 // pred_check_branch
      %42 = sbr.rel (0) target = $region29
    $region28: #{tpu_custom_call.1} parent=1 // pred_region
      _
    $region29: #{tpu_custom_call.1} parent=1 // pred_fallthru
      _
    // Predicated region
    $region30: #{tpu_custom_call.1} parent=1 // pred_check
      _
    $region31: #{tpu_custom_call.1} parent=1 // pred_check_branch
      %44 = sbr.rel (0) target = $region33
    $region32: #{tpu_custom_call.1} parent=1 // pred_region
      _
    $region33: #{tpu_custom_call.1} parent=1 // pred_fallthru
      _
    // Predicated region
    $region34: #{tpu_custom_call.1} parent=1 // pred_check
      _
    $region35: #{tpu_custom_call.1} parent=1 // pred_check_branch
      %46 = sbr.rel (0) target = $region37
    $region36: #{tpu_custom_call.1} parent=1 // pred_region
      %47 = dma.done [#allocation4], 256
    $region37: #{tpu_custom_call.1} parent=1 // pred_fallthru
      _
    %v48 = vld [vmem:[#allocation3] sm:$0xff]
    %v49 = vld [vmem:[#allocation3 + $0x8] sm:$0xff]
    %v50 = vld [vmem:[%s4] sm:$0xff]
    %v51 = vld [vmem:[%s4 + $0x8] sm:$0xff]
    %v52 = vld [vmem:[%s4 + $0x10] sm:$0xff]
    %v53 = vld [vmem:[%s4 + $0x18] sm:$0xff]
    %v54 = vld [vmem:[%s6] sm:$0xff]
    %v55 = vld [vmem:[%s6 + $0x8] sm:$0xff]
    %v56 = vld [vmem:[%s6 + $0x10] sm:$0xff]
    %v57 = vld [vmem:[%s6 + $0x18] sm:$0xff]
    %v58 = vld [vmem:[%s0] sm:$0xff]
    %v59 = vld [vmem:[%s0 + $0x8] sm:$0xff]
    %v60 = vmax.f32 %v58, 0.0
    %v61 = vmax.f32 %v59, 0.0
    %v62 = vld [vmem:[%s5] sm:$0x1]
    %v64 = vlaneseq
    %v65 = vshrl.u32 %v64, 7
    %v66 = vsub.s32 0, %v65
    %v67 = vrot.slane %v62, %v66
    %vm69 = vcmask 130048
    %v71 = vsel %vm69, %v60, 0
    %v74 = vsel %vm69, %v61, 0
    %76 = vmatprep.subr.mxu0 0.0
    %77 = vmatpush1.msra.mxu0 %v48
    %78 = vmatprep.subr.mxu0 0.0
    %79 = vmatpush1.msra.mxu0 %v49
    %80 = vmatprep.subr.mxu0 0.0
    %81 = vmatpush1.msra.mxu0 0.0
    %82 = vmatprep.subr.mxu0 0.0
    %83 = vmatpush1.msra.mxu0 0.0
    %84 = vmatprep.subr.mxu0 0.0
    %85 = vmatpush1.msra.mxu0 0.0
    %86 = vmatprep.subr.mxu0 0.0
    %87 = vmatpush1.msra.mxu0 0.0
    %88 = vmatprep.subr.mxu0 0.0
    %89 = vmatpush1.msra.mxu0 0.0
    %90 = vmatprep.subr.mxu0 0.0
    %91 = vmatpush1.msra.mxu0 0.0
    %92 = vmatprep.subr.mxu0 0.0
    %93 = vmatpush1.msra.mxu0 0.0
    %94 = vmatprep.subr.mxu0 0.0
    %95 = vmatpush1.msra.mxu0 0.0
    %96 = vmatprep.subr.mxu0 0.0
    %97 = vmatpush1.msra.mxu0 0.0
    %98 = vmatprep.subr.mxu0 0.0
    %99 = vmatpush1.msra.mxu0 0.0
    %100 = vmatprep.subr.mxu0 0.0
    %101 = vmatpush1.msra.mxu0 0.0
    %102 = vmatprep.subr.mxu0 0.0
    %103 = vmatpush1.msra.mxu0 0.0
    %104 = vmatprep.subr.mxu0 0.0
    %105 = vmatpush1.msra.mxu0 0.0
    %106 = vmatprep.subr.mxu0 0.0
    %107 = vmatpush1.msra.mxu0 0.0
    %108 = vmatprep.subr.mxu0 0.0
    %109 = vmatpush1.msra.mxu0 0.0
    %110 = vmatprep.subr.mxu0 0.0
    %111 = vmatpush1.msra.mxu0 0.0
    %112 = vmatprep.subr.mxu0 0.0
    %113 = vmatpush1.msra.mxu0 0.0
    %114 = vmatprep.subr.mxu0 0.0
    %115 = vmatpush1.msra.mxu0 0.0
    %116 = vmatprep.subr.mxu0 0.0
    %117 = vmatpush1.msra.mxu0 0.0
    %118 = vmatprep.subr.mxu0 0.0
    %119 = vmatpush1.msra.mxu0 0.0
    %120 = vmatprep.subr.mxu0 0.0
    %121 = vmatpush1.msra.mxu0 0.0
    %122 = vmatprep.subr.mxu0 0.0
    %123 = vmatpush1.msra.mxu0 0.0
    %124 = vmatprep.subr.mxu0 0.0
    %125 = vmatpush1.msra.mxu0 0.0
    %126 = vmatprep.subr.mxu0 0.0
    %127 = vmatpush1.msra.mxu0 0.0
    %128 = vmatprep.subr.mxu0 0.0
    %129 = vmatpush1.msra.mxu0 0.0
    %130 = vmatprep.subr.mxu0 0.0
    %131 = vmatpush1.msra.mxu0 0.0
    %132 = vmatprep.subr.mxu0 0.0
    %133 = vmatpush1.msra.mxu0 0.0
    %134 = vmatprep.subr.mxu0 0.0
    %135 = vmatpush1.msra.mxu0 0.0
    %136 = vmatprep.subr.mxu0 0.0
    %137 = vmatpush1.msra.mxu0 0.0
    %138 = vmatprep.subr.mxu0 0.0
    %139 = vmatpush1.msra.mxu0 0.0
    %140 = vmatprep.mubr.f32.mxu0 0.0
    %141 = vmatmul.mubr.f32.gmra.mrb[0].mxu0 %v71
    %v142 = vpop.f32.mrb[0].mxu0
    %v143 = vadd.f32 %v67, %v142
    %v144 = vpop.f32.mrb[0].mxu0
    %145 = vmatprep.mubr.f32.mxu0 0.0
    %146 = vmatmul.mubr.f32.gmra.mrb[0].mxu0 %v74
    %v147 = vpop.f32.mrb[0].mxu0
    %v148 = vadd.f32 %v67, %v147
    %v149 = vpop.f32.mrb[0].mxu0
    %150 = vdwg.mxu0
    %151 = vst [vmem:[#allocation2] sm:$0xff] %v143
    %152 = vst [vmem:[#allocation2 + $0x8] sm:$0xff] %v148
    %v153 = vld [vmem:[%s1] sm:$0x3]
    %v154 = vld [vmem:[%s2] sm:$0x3]
    %v155 = vld [vmem:[#allocation2] sm:$0x3]
    %vm156 = vcmask 261120
    %v158 = vsel %vm156, %v153, 0
    %160 = vmatprep.subr.mxu0 0.0
    %161 = vmatpush1.msra.mxu0 %v50
    %162 = vmatprep.subr.mxu0 0.0
    %163 = vmatpush1.msra.mxu0 %v51
    %164 = vmatprep.subr.mxu0 0.0
    %165 = vmatpush1.msra.mxu0 %v52
    %166 = vmatprep.subr.mxu0 0.0
    %167 = vmatpush1.msra.mxu0 %v53
    %168 = vmatprep.subr.mxu0 0.0
    %169 = vmatpush1.msra.mxu0 0.0
    %170 = vmatprep.subr.mxu0 0.0
    %171 = vmatpush1.msra.mxu0 0.0
    %172 = vmatprep.subr.mxu0 0.0
    %173 = vmatpush1.msra.mxu0 0.0
    %174 = vmatprep.subr.mxu0 0.0
    %175 = vmatpush1.msra.mxu0 0.0
    %176 = vmatprep.subr.mxu0 0.0
    %177 = vmatpush1.msra.mxu0 0.0
    %178 = vmatprep.subr.mxu0 0.0
    %179 = vmatpush1.msra.mxu0 0.0
    %180 = vmatprep.subr.mxu0 0.0
    %181 = vmatpush1.msra.mxu0 0.0
    %182 = vmatprep.subr.mxu0 0.0
    %183 = vmatpush1.msra.mxu0 0.0
    %184 = vmatprep.subr.mxu0 0.0
    %185 = vmatpush1.msra.mxu0 0.0
    %186 = vmatprep.subr.mxu0 0.0
    %187 = vmatpush1.msra.mxu0 0.0
    %188 = vmatprep.subr.mxu0 0.0
    %189 = vmatpush1.msra.mxu0 0.0
    %190 = vmatprep.subr.mxu0 0.0
    %191 = vmatpush1.msra.mxu0 0.0
    %192 = vmatprep.subr.mxu0 0.0
    %193 = vmatpush1.msra.mxu0 0.0
    %194 = vmatprep.subr.mxu0 0.0
    %195 = vmatpush1.msra.mxu0 0.0
    %196 = vmatprep.subr.mxu0 0.0
    %197 = vmatpush1.msra.mxu0 0.0
    %198 = vmatprep.subr.mxu0 0.0
    %199 = vmatpush1.msra.mxu0 0.0
    %200 = vmatprep.subr.mxu0 0.0
    %201 = vmatpush1.msra.mxu0 0.0
    %202 = vmatprep.subr.mxu0 0.0
    %203 = vmatpush1.msra.mxu0 0.0
    %204 = vmatprep.subr.mxu0 0.0
    %205 = vmatpush1.msra.mxu0 0.0
    %206 = vmatprep.subr.mxu0 0.0
    %207 = vmatpush1.msra.mxu0 0.0
    %208 = vmatprep.subr.mxu0 0.0
    %209 = vmatpush1.msra.mxu0 0.0
    %210 = vmatprep.subr.mxu0 0.0
    %211 = vmatpush1.msra.mxu0 0.0
    %212 = vmatprep.subr.mxu0 0.0
    %213 = vmatpush1.msra.mxu0 0.0
    %214 = vmatprep.subr.mxu0 0.0
    %215 = vmatpush1.msra.mxu0 0.0
    %216 = vmatprep.subr.mxu0 0.0
    %217 = vmatpush1.msra.mxu0 0.0
    %218 = vmatprep.subr.mxu0 0.0
    %219 = vmatpush1.msra.mxu0 0.0
    %220 = vmatprep.subr.mxu0 0.0
    %221 = vmatpush1.msra.mxu0 0.0
    %222 = vmatprep.subr.mxu0 0.0
    %223 = vmatpush1.msra.mxu0 0.0
    %224 = vmatprep.mubr.f32.mxu0 0.0
    %225 = vmatmul.mubr.f32.gmra.mrb[0].mxu0 %v158
    %v226 = vpop.f32.mrb[0].mxu0
    %v227 = vadd.f32 %v155, %v226
    %v228 = vpop.f32.mrb[0].mxu0
    %229 = vdwg.mxu0
    %v230 = vxor.u32 %v227, 2147483648
    %v231 = vmul.f32 %v230, 1.442695
    %v232 = vpow.pop %v231
    %v233 = vadd.f32 %v232, 1.0
    %v234 = vrcp.pop %v233
    %v235 = vmul.f32 1.0, %v234
    %v236 = vtanh.pop %v227
    %238 = vrot.lane.b32.xlu0 %v154, 32
    %v239 = vpop.permute.xlu0 %238
    %v241 = vmul.f32 %v235, %v239
    %243 = vrot.lane.b32.xlu0 %v236, 64
    %v244 = vpop.permute.xlu0 %243
    %v246 = vmul.f32 %v235, %v244
    %248 = vrot.lane.b32.xlu0 %v246, 32
    %v249 = vpop.permute.xlu0 %248
    %v251 = vadd.f32 %v241, %v249
    %v252 = vtanh.pop %v251
    %254 = vrot.lane.b32.xlu0 %v252, 64
    %v255 = vpop.permute.xlu0 %254
    %v257 = vmul.f32 %v235, %v255
    %v258 = vld [vmem:[%s7] sm:$0x1]
    %v260 = vlaneseq
    %v261 = vshrl.u32 %v260, 7
    %v262 = vsub.s32 0, %v261
    %v263 = vrot.slane %v258, %v262
    %266 = vrot.lane.b32.xlu0 %v257, 32
    %v267 = vpop.permute.xlu0 %266
    %v268 = vsel %vm156, %v267, 0
    %270 = vmatprep.subr.mxu0 0.0
    %271 = vmatpush1.msra.mxu0 %v54
    %272 = vmatprep.subr.mxu0 0.0
    %273 = vmatpush1.msra.mxu0 %v55
    %274 = vmatprep.subr.mxu0 0.0
    %275 = vmatpush1.msra.mxu0 %v56
    %276 = vmatprep.subr.mxu0 0.0
    %277 = vmatpush1.msra.mxu0 %v57
    %278 = vmatprep.subr.mxu0 0.0
    %279 = vmatpush1.msra.mxu0 0.0
    %280 = vmatprep.subr.mxu0 0.0
    %281 = vmatpush1.msra.mxu0 0.0
    %282 = vmatprep.subr.mxu0 0.0
    %283 = vmatpush1.msra.mxu0 0.0
    %284 = vmatprep.subr.mxu0 0.0
    %285 = vmatpush1.msra.mxu0 0.0
    %286 = vmatprep.subr.mxu0 0.0
    %287 = vmatpush1.msra.mxu0 0.0
    %288 = vmatprep.subr.mxu0 0.0
    %289 = vmatpush1.msra.mxu0 0.0
    %290 = vmatprep.subr.mxu0 0.0
    %291 = vmatpush1.msra.mxu0 0.0
    %292 = vmatprep.subr.mxu0 0.0
    %293 = vmatpush1.msra.mxu0 0.0
    %294 = vmatprep.subr.mxu0 0.0
    %295 = vmatpush1.msra.mxu0 0.0
    %296 = vmatprep.subr.mxu0 0.0
    %297 = vmatpush1.msra.mxu0 0.0
    %298 = vmatprep.subr.mxu0 0.0
    %299 = vmatpush1.msra.mxu0 0.0
    %300 = vmatprep.subr.mxu0 0.0
    %301 = vmatpush1.msra.mxu0 0.0
    %302 = vmatprep.subr.mxu0 0.0
    %303 = vmatpush1.msra.mxu0 0.0
    %304 = vmatprep.subr.mxu0 0.0
    %305 = vmatpush1.msra.mxu0 0.0
    %306 = vmatprep.subr.mxu0 0.0
    %307 = vmatpush1.msra.mxu0 0.0
    %308 = vmatprep.subr.mxu0 0.0
    %309 = vmatpush1.msra.mxu0 0.0
    %310 = vmatprep.subr.mxu0 0.0
    %311 = vmatpush1.msra.mxu0 0.0
    %312 = vmatprep.subr.mxu0 0.0
    %313 = vmatpush1.msra.mxu0 0.0
    %314 = vmatprep.subr.mxu0 0.0
    %315 = vmatpush1.msra.mxu0 0.0
    %316 = vmatprep.subr.mxu0 0.0
    %317 = vmatpush1.msra.mxu0 0.0
    %318 = vmatprep.subr.mxu0 0.0
    %319 = vmatpush1.msra.mxu0 0.0
    %320 = vmatprep.subr.mxu0 0.0
    %321 = vmatpush1.msra.mxu0 0.0
    %322 = vmatprep.subr.mxu0 0.0
    %323 = vmatpush1.msra.mxu0 0.0
    %324 = vmatprep.subr.mxu0 0.0
    %325 = vmatpush1.msra.mxu0 0.0
    %326 = vmatprep.subr.mxu0 0.0
    %327 = vmatpush1.msra.mxu0 0.0
    %328 = vmatprep.subr.mxu0 0.0
    %329 = vmatpush1.msra.mxu0 0.0
    %330 = vmatprep.subr.mxu0 0.0
    %331 = vmatpush1.msra.mxu0 0.0
    %332 = vmatprep.subr.mxu0 0.0
    %333 = vmatpush1.msra.mxu0 0.0
    %334 = vmatprep.mubr.f32.mxu0 0.0
    %335 = vmatmul.mubr.f32.gmra.mrb[0].mxu0 %v268
    %v336 = vpop.f32.mrb[0].mxu0
    %v337 = vadd.f32 %v263, %v336
    %v338 = vpop.f32.mrb[0].mxu0
    %339 = vdwg.mxu0
    %vm340 = vcmask 123904
    %341 = vst.msk [vmem:[#allocation6] sm:$0x3] %vm340, %v337
    %vm343 = vcmask 254976
    %344 = vst.msk [vmem:[#allocation7] sm:$0x3] %vm343, %v267
    %346 = vrot.lane.b32.xlu0 %v251, 96
    %v347 = vpop.permute.xlu0 %346
    %349 = vst.msk [vmem:[#allocation9] sm:$0x3] %vm343, %v347
    %v350 = vld [vmem:[#allocation2 + $0x2] sm:$0x3]
    %v351 = vld [vmem:[#allocation7] sm:$0x3]
    %v352 = vld [vmem:[#allocation9] sm:$0x3]
    %v354 = vsel %vm156, %v351, 0
    %356 = vmatprep.subr.mxu0 0.0
    %357 = vmatpush1.msra.mxu0 %v50
    %358 = vmatprep.subr.mxu0 0.0
    %359 = vmatpush1.msra.mxu0 %v51
    %360 = vmatprep.subr.mxu0 0.0
    %361 = vmatpush1.msra.mxu0 %v52
    %362 = vmatprep.subr.mxu0 0.0
    %363 = vmatpush1.msra.mxu0 %v53
    %364 = vmatprep.subr.mxu0 0.0
    %365 = vmatpush1.msra.mxu0 0.0
    %366 = vmatprep.subr.mxu0 0.0
    %367 = vmatpush1.msra.mxu0 0.0
    %368 = vmatprep.subr.mxu0 0.0
    %369 = vmatpush1.msra.mxu0 0.0
    %370 = vmatprep.subr.mxu0 0.0
    %371 = vmatpush1.msra.mxu0 0.0
    %372 = vmatprep.subr.mxu0 0.0
    %373 = vmatpush1.msra.mxu0 0.0
    %374 = vmatprep.subr.mxu0 0.0
    %375 = vmatpush1.msra.mxu0 0.0
    %376 = vmatprep.subr.mxu0 0.0
    %377 = vmatpush1.msra.mxu0 0.0
    %378 = vmatprep.subr.mxu0 0.0
    %379 = vmatpush1.msra.mxu0 0.0
    %380 = vmatprep.subr.mxu0 0.0
    %381 = vmatpush1.msra.mxu0 0.0
    %382 = vmatprep.subr.mxu0 0.0
    %383 = vmatpush1.msra.mxu0 0.0
    %384 = vmatprep.subr.mxu0 0.0
    %385 = vmatpush1.msra.mxu0 0.0
    %386 = vmatprep.subr.mxu0 0.0
    %387 = vmatpush1.msra.mxu0 0.0
    %388 = vmatprep.subr.mxu0 0.0
    %389 = vmatpush1.msra.mxu0 0.0
    %390 = vmatprep.subr.mxu0 0.0
    %391 = vmatpush1.msra.mxu0 0.0
    %392 = vmatprep.subr.mxu0 0.0
    %393 = vmatpush1.msra.mxu0 0.0
    %394 = vmatprep.subr.mxu0 0.0
    %395 = vmatpush1.msra.mxu0 0.0
    %396 = vmatprep.subr.mxu0 0.0
    %397 = vmatpush1.msra.mxu0 0.0
    %398 = vmatprep.subr.mxu0 0.0
    %399 = vmatpush1.msra.mxu0 0.0
    %400 = vmatprep.subr.mxu0 0.0
    %401 = vmatpush1.msra.mxu0 0.0
    %402 = vmatprep.subr.mxu0 0.0
    %403 = vmatpush1.msra.mxu0 0.0
    %404 = vmatprep.subr.mxu0 0.0
    %405 = vmatpush1.msra.mxu0 0.0
    %406 = vmatprep.subr.mxu0 0.0
    %407 = vmatpush1.msra.mxu0 0.0
    %408 = vmatprep.subr.mxu0 0.0
    %409 = vmatpush1.msra.mxu0 0.0
    %410 = vmatprep.subr.mxu0 0.0
    %411 = vmatpush1.msra.mxu0 0.0
    %412 = vmatprep.subr.mxu0 0.0
    %413 = vmatpush1.msra.mxu0 0.0
    %414 = vmatprep.subr.mxu0 0.0
    %415 = vmatpush1.msra.mxu0 0.0
    %416 = vmatprep.subr.mxu0 0.0
    %417 = vmatpush1.msra.mxu0 0.0
    %418 = vmatprep.subr.mxu0 0.0
    %419 = vmatpush1.msra.mxu0 0.0
    %420 = vmatprep.mubr.f32.mxu0 0.0
    %421 = vmatmul.mubr.f32.gmra.mrb[0].mxu0 %v354
    %v422 = vpop.f32.mrb[0].mxu0
    %v423 = vadd.f32 %v350, %v422
    %v424 = vpop.f32.mrb[0].mxu0
    %425 = vdwg.mxu0
    %v426 = vxor.u32 %v423, 2147483648
    %v427 = vmul.f32 %v426, 1.442695
    %v428 = vpow.pop %v427
    %v429 = vadd.f32 %v428, 1.0
    %v430 = vrcp.pop %v429
    %v431 = vmul.f32 1.0, %v430
    %v432 = vtanh.pop %v423
    %434 = vrot.lane.b32.xlu0 %v352, 32
    %v435 = vpop.permute.xlu0 %434
    %v437 = vmul.f32 %v431, %v435
    %439 = vrot.lane.b32.xlu0 %v432, 64
    %v440 = vpop.permute.xlu0 %439
    %v442 = vmul.f32 %v431, %v440
    %444 = vrot.lane.b32.xlu0 %v442, 32
    %v445 = vpop.permute.xlu0 %444
    %v447 = vadd.f32 %v437, %v445
    %v448 = vtanh.pop %v447
    %450 = vrot.lane.b32.xlu0 %v448, 64
    %v451 = vpop.permute.xlu0 %450
    %v453 = vmul.f32 %v431, %v451
    %455 = vrot.lane.b32.xlu0 %v453, 32
    %v456 = vpop.permute.xlu0 %455
    %458 = vst.msk [vmem:[#allocation7] sm:$0x3] %vm343, %v456
    %460 = vrot.lane.b32.xlu0 %v447, 96
    %v461 = vpop.permute.xlu0 %460
    %463 = vst.msk [vmem:[#allocation9] sm:$0x3] %vm343, %v461
    %v464 = vld [vmem:[#allocation2 + $0x4] sm:$0x3]
    %v465 = vld [vmem:[#allocation7] sm:$0x3]
    %v466 = vld [vmem:[#allocation9] sm:$0x3]
    %v468 = vsel %vm156, %v465, 0
    %470 = vmatprep.subr.mxu0 0.0
    %471 = vmatpush1.msra.mxu0 %v50
    %472 = vmatprep.subr.mxu0 0.0
    %473 = vmatpush1.msra.mxu0 %v51
    %474 = vmatprep.subr.mxu0 0.0
    %475 = vmatpush1.msra.mxu0 %v52
    %476 = vmatprep.subr.mxu0 0.0
    %477 = vmatpush1.msra.mxu0 %v53
    %478 = vmatprep.subr.mxu0 0.0
    %479 = vmatpush1.msra.mxu0 0.0
    %480 = vmatprep.subr.mxu0 0.0
    %481 = vmatpush1.msra.mxu0 0.0
    %482 = vmatprep.subr.mxu0 0.0
    %483 = vmatpush1.msra.mxu0 0.0
    %484 = vmatprep.subr.mxu0 0.0
    %485 = vmatpush1.msra.mxu0 0.0
    %486 = vmatprep.subr.mxu0 0.0
    %487 = vmatpush1.msra.mxu0 0.0
    %488 = vmatprep.subr.mxu0 0.0
    %489 = vmatpush1.msra.mxu0 0.0
    %490 = vmatprep.subr.mxu0 0.0
    %491 = vmatpush1.msra.mxu0 0.0
    %492 = vmatprep.subr.mxu0 0.0
    %493 = vmatpush1.msra.mxu0 0.0
    %494 = vmatprep.subr.mxu0 0.0
    %495 = vmatpush1.msra.mxu0 0.0
    %496 = vmatprep.subr.mxu0 0.0
    %497 = vmatpush1.msra.mxu0 0.0
    %498 = vmatprep.subr.mxu0 0.0
    %499 = vmatpush1.msra.mxu0 0.0
    %500 = vmatprep.subr.mxu0 0.0
    %501 = vmatpush1.msra.mxu0 0.0
    %502 = vmatprep.subr.mxu0 0.0
    %503 = vmatpush1.msra.mxu0 0.0
    %504 = vmatprep.subr.mxu0 0.0
    %505 = vmatpush1.msra.mxu0 0.0
    %506 = vmatprep.subr.mxu0 0.0
    %507 = vmatpush1.msra.mxu0 0.0
    %508 = vmatprep.subr.mxu0 0.0
    %509 = vmatpush1.msra.mxu0 0.0
    %510 = vmatprep.subr.mxu0 0.0
    %511 = vmatpush1.msra.mxu0 0.0
    %512 = vmatprep.subr.mxu0 0.0
    %513 = vmatpush1.msra.mxu0 0.0
    %514 = vmatprep.subr.mxu0 0.0
    %515 = vmatpush1.msra.mxu0 0.0
    %516 = vmatprep.subr.mxu0 0.0
    %517 = vmatpush1.msra.mxu0 0.0
    %518 = vmatprep.subr.mxu0 0.0
    %519 = vmatpush1.msra.mxu0 0.0
    %520 = vmatprep.subr.mxu0 0.0
    %521 = vmatpush1.msra.mxu0 0.0
    %522 = vmatprep.subr.mxu0 0.0
    %523 = vmatpush1.msra.mxu0 0.0
    %524 = vmatprep.subr.mxu0 0.0
    %525 = vmatpush1.msra.mxu0 0.0
    %526 = vmatprep.subr.mxu0 0.0
    %527 = vmatpush1.msra.mxu0 0.0
    %528 = vmatprep.subr.mxu0 0.0
    %529 = vmatpush1.msra.mxu0 0.0
    %530 = vmatprep.subr.mxu0 0.0
    %531 = vmatpush1.msra.mxu0 0.0
    %532 = vmatprep.subr.mxu0 0.0
    %533 = vmatpush1.msra.mxu0 0.0
    %534 = vmatprep.mubr.f32.mxu0 0.0
    %535 = vmatmul.mubr.f32.gmra.mrb[0].mxu0 %v468
    %v536 = vpop.f32.mrb[0].mxu0
    %v537 = vadd.f32 %v464, %v536
    %v538 = vpop.f32.mrb[0].mxu0
    %539 = vdwg.mxu0
    %v540 = vxor.u32 %v537, 2147483648
    %v541 = vmul.f32 %v540, 1.442695
    %v542 = vpow.pop %v541
    %v543 = vadd.f32 %v542, 1.0
    %v544 = vrcp.pop %v543
    %v545 = vmul.f32 1.0, %v544
    %v546 = vtanh.pop %v537
    %548 = vrot.lane.b32.xlu0 %v466, 32
    %v549 = vpop.permute.xlu0 %548
    %v551 = vmul.f32 %v545, %v549
    %553 = vrot.lane.b32.xlu0 %v546, 64
    %v554 = vpop.permute.xlu0 %553
    %v556 = vmul.f32 %v545, %v554
    %558 = vrot.lane.b32.xlu0 %v556, 32
    %v559 = vpop.permute.xlu0 %558
    %v561 = vadd.f32 %v551, %v559
    %v562 = vtanh.pop %v561
    %564 = vrot.lane.b32.xlu0 %v562, 64
    %v565 = vpop.permute.xlu0 %564
    %v567 = vmul.f32 %v545, %v565
    %569 = vrot.lane.b32.xlu0 %v567, 32
    %v570 = vpop.permute.xlu0 %569
    %572 = vst.msk [vmem:[#allocation7] sm:$0x3] %vm343, %v570
    %574 = vrot.lane.b32.xlu0 %v561, 96
    %v575 = vpop.permute.xlu0 %574
    %577 = vst.msk [vmem:[#allocation9] sm:$0x3] %vm343, %v575
    %v578 = vld [vmem:[#allocation2 + $0x6] sm:$0x3]
    %v579 = vld [vmem:[#allocation7] sm:$0x3]
    %v580 = vld [vmem:[#allocation9] sm:$0x3]
    %v582 = vsel %vm156, %v579, 0
    %584 = vmatprep.subr.mxu0 0.0
    %585 = vmatpush1.msra.mxu0 %v50
    %586 = vmatprep.subr.mxu0 0.0
    %587 = vmatpush1.msra.mxu0 %v51
    %588 = vmatprep.subr.mxu0 0.0
    %589 = vmatpush1.msra.mxu0 %v52
    %590 = vmatprep.subr.mxu0 0.0
    %591 = vmatpush1.msra.mxu0 %v53
    %592 = vmatprep.subr.mxu0 0.0
    %593 = vmatpush1.msra.mxu0 0.0
    %594 = vmatprep.subr.mxu0 0.0
    %595 = vmatpush1.msra.mxu0 0.0
    %596 = vmatprep.subr.mxu0 0.0
    %597 = vmatpush1.msra.mxu0 0.0
    %598 = vmatprep.subr.mxu0 0.0
    %599 = vmatpush1.msra.mxu0 0.0
    %600 = vmatprep.subr.mxu0 0.0
    %601 = vmatpush1.msra.mxu0 0.0
    %602 = vmatprep.subr.mxu0 0.0
    %603 = vmatpush1.msra.mxu0 0.0
    %604 = vmatprep.subr.mxu0 0.0
    %605 = vmatpush1.msra.mxu0 0.0
    %606 = vmatprep.subr.mxu0 0.0
    %607 = vmatpush1.msra.mxu0 0.0
    %608 = vmatprep.subr.mxu0 0.0
    %609 = vmatpush1.msra.mxu0 0.0
    %610 = vmatprep.subr.mxu0 0.0
    %611 = vmatpush1.msra.mxu0 0.0
    %612 = vmatprep.subr.mxu0 0.0
    %613 = vmatpush1.msra.mxu0 0.0
    %614 = vmatprep.subr.mxu0 0.0
    %615 = vmatpush1.msra.mxu0 0.0
    %616 = vmatprep.subr.mxu0 0.0
    %617 = vmatpush1.msra.mxu0 0.0
    %618 = vmatprep.subr.mxu0 0.0
    %619 = vmatpush1.msra.mxu0 0.0
    %620 = vmatprep.subr.mxu0 0.0
    %621 = vmatpush1.msra.mxu0 0.0
    %622 = vmatprep.subr.mxu0 0.0
    %623 = vmatpush1.msra.mxu0 0.0
    %624 = vmatprep.subr.mxu0 0.0
    %625 = vmatpush1.msra.mxu0 0.0
    %626 = vmatprep.subr.mxu0 0.0
    %627 = vmatpush1.msra.mxu0 0.0
    %628 = vmatprep.subr.mxu0 0.0
    %629 = vmatpush1.msra.mxu0 0.0
    %630 = vmatprep.subr.mxu0 0.0
    %631 = vmatpush1.msra.mxu0 0.0
    %632 = vmatprep.subr.mxu0 0.0
    %633 = vmatpush1.msra.mxu0 0.0
    %634 = vmatprep.subr.mxu0 0.0
    %635 = vmatpush1.msra.mxu0 0.0
    %636 = vmatprep.subr.mxu0 0.0
    %637 = vmatpush1.msra.mxu0 0.0
    %638 = vmatprep.subr.mxu0 0.0
    %639 = vmatpush1.msra.mxu0 0.0
    %640 = vmatprep.subr.mxu0 0.0
    %641 = vmatpush1.msra.mxu0 0.0
    %642 = vmatprep.subr.mxu0 0.0
    %643 = vmatpush1.msra.mxu0 0.0
    %644 = vmatprep.subr.mxu0 0.0
    %645 = vmatpush1.msra.mxu0 0.0
    %646 = vmatprep.subr.mxu0 0.0
    %647 = vmatpush1.msra.mxu0 0.0
    %648 = vmatprep.mubr.f32.mxu0 0.0
    %649 = vmatmul.mubr.f32.gmra.mrb[0].mxu0 %v582
    %v650 = vpop.f32.mrb[0].mxu0
    %v651 = vadd.f32 %v578, %v650
    %v652 = vpop.f32.mrb[0].mxu0
    %653 = vdwg.mxu0
    %v654 = vxor.u32 %v651, 2147483648
    %v655 = vmul.f32 %v654, 1.442695
    %v656 = vpow.pop %v655
    %v657 = vadd.f32 %v656, 1.0
    %v658 = vrcp.pop %v657
    %v659 = vmul.f32 1.0, %v658
    %v660 = vtanh.pop %v651
    %662 = vrot.lane.b32.xlu0 %v580, 32
    %v663 = vpop.permute.xlu0 %662
    %v665 = vmul.f32 %v659, %v663
    %667 = vrot.lane.b32.xlu0 %v660, 64
    %v668 = vpop.permute.xlu0 %667
    %v670 = vmul.f32 %v659, %v668
    %672 = vrot.lane.b32.xlu0 %v670, 32
    %v673 = vpop.permute.xlu0 %672
    %v675 = vadd.f32 %v665, %v673
    %v676 = vtanh.pop %v675
    %678 = vrot.lane.b32.xlu0 %v676, 64
    %v679 = vpop.permute.xlu0 %678
    %v681 = vmul.f32 %v659, %v679
    %683 = vrot.lane.b32.xlu0 %v681, 32
    %v684 = vpop.permute.xlu0 %683
    %686 = vst.msk [vmem:[#allocation7] sm:$0x3] %vm343, %v684
    %688 = vrot.lane.b32.xlu0 %v675, 96
    %v689 = vpop.permute.xlu0 %688
    %691 = vst.msk [vmem:[#allocation9] sm:$0x3] %vm343, %v689
    %v692 = vld [vmem:[#allocation2 + $0x8] sm:$0x3]
    %v693 = vld [vmem:[#allocation7] sm:$0x3]
    %v694 = vld [vmem:[#allocation9] sm:$0x3]
    %v696 = vsel %vm156, %v693, 0
    %698 = vmatprep.subr.mxu0 0.0
    %699 = vmatpush1.msra.mxu0 %v50
    %700 = vmatprep.subr.mxu0 0.0
    %701 = vmatpush1.msra.mxu0 %v51
    %702 = vmatprep.subr.mxu0 0.0
    %703 = vmatpush1.msra.mxu0 %v52
    %704 = vmatprep.subr.mxu0 0.0
    %705 = vmatpush1.msra.mxu0 %v53
    %706 = vmatprep.subr.mxu0 0.0
    %707 = vmatpush1.msra.mxu0 0.0
    %708 = vmatprep.subr.mxu0 0.0
    %709 = vmatpush1.msra.mxu0 0.0
    %710 = vmatprep.subr.mxu0 0.0
    %711 = vmatpush1.msra.mxu0 0.0
    %712 = vmatprep.subr.mxu0 0.0
    %713 = vmatpush1.msra.mxu0 0.0
    %714 = vmatprep.subr.mxu0 0.0
    %715 = vmatpush1.msra.mxu0 0.0
    %716 = vmatprep.subr.mxu0 0.0
    %717 = vmatpush1.msra.mxu0 0.0
    %718 = vmatprep.subr.mxu0 0.0
    %719 = vmatpush1.msra.mxu0 0.0
    %720 = vmatprep.subr.mxu0 0.0
    %721 = vmatpush1.msra.mxu0 0.0
    %722 = vmatprep.subr.mxu0 0.0
    %723 = vmatpush1.msra.mxu0 0.0
    %724 = vmatprep.subr.mxu0 0.0
    %725 = vmatpush1.msra.mxu0 0.0
    %726 = vmatprep.subr.mxu0 0.0
    %727 = vmatpush1.msra.mxu0 0.0
    %728 = vmatprep.subr.mxu0 0.0
    %729 = vmatpush1.msra.mxu0 0.0
    %730 = vmatprep.subr.mxu0 0.0
    %731 = vmatpush1.msra.mxu0 0.0
    %732 = vmatprep.subr.mxu0 0.0
    %733 = vmatpush1.msra.mxu0 0.0
    %734 = vmatprep.subr.mxu0 0.0
    %735 = vmatpush1.msra.mxu0 0.0
    %736 = vmatprep.subr.mxu0 0.0
    %737 = vmatpush1.msra.mxu0 0.0
    %738 = vmatprep.subr.mxu0 0.0
    %739 = vmatpush1.msra.mxu0 0.0
    %740 = vmatprep.subr.mxu0 0.0
    %741 = vmatpush1.msra.mxu0 0.0
    %742 = vmatprep.subr.mxu0 0.0
    %743 = vmatpush1.msra.mxu0 0.0
    %744 = vmatprep.subr.mxu0 0.0
    %745 = vmatpush1.msra.mxu0 0.0
    %746 = vmatprep.subr.mxu0 0.0
    %747 = vmatpush1.msra.mxu0 0.0
    %748 = vmatprep.subr.mxu0 0.0
    %749 = vmatpush1.msra.mxu0 0.0
    %750 = vmatprep.subr.mxu0 0.0
    %751 = vmatpush1.msra.mxu0 0.0
    %752 = vmatprep.subr.mxu0 0.0
    %753 = vmatpush1.msra.mxu0 0.0
    %754 = vmatprep.subr.mxu0 0.0
    %755 = vmatpush1.msra.mxu0 0.0
    %756 = vmatprep.subr.mxu0 0.0
    %757 = vmatpush1.msra.mxu0 0.0
    %758 = vmatprep.subr.mxu0 0.0
    %759 = vmatpush1.msra.mxu0 0.0
    %760 = vmatprep.subr.mxu0 0.0
    %761 = vmatpush1.msra.mxu0 0.0
    %762 = vmatprep.mubr.f32.mxu0 0.0
    %763 = vmatmul.mubr.f32.gmra.mrb[0].mxu0 %v696
    %v764 = vpop.f32.mrb[0].mxu0
    %v765 = vadd.f32 %v692, %v764
    %v766 = vpop.f32.mrb[0].mxu0
    %767 = vdwg.mxu0
    %v768 = vxor.u32 %v765, 2147483648
    %v769 = vmul.f32 %v768, 1.442695
    %v770 = vpow.pop %v769
    %v771 = vadd.f32 %v770, 1.0
    %v772 = vrcp.pop %v771
    %v773 = vmul.f32 1.0, %v772
    %v774 = vtanh.pop %v765
    %776 = vrot.lane.b32.xlu0 %v694, 32
    %v777 = vpop.permute.xlu0 %776
    %v779 = vmul.f32 %v773, %v777
    %781 = vrot.lane.b32.xlu0 %v774, 64
    %v782 = vpop.permute.xlu0 %781
    %v784 = vmul.f32 %v773, %v782
    %786 = vrot.lane.b32.xlu0 %v784, 32
    %v787 = vpop.permute.xlu0 %786
    %v789 = vadd.f32 %v779, %v787
    %v790 = vtanh.pop %v789
    %792 = vrot.lane.b32.xlu0 %v790, 64
    %v793 = vpop.permute.xlu0 %792
    %v795 = vmul.f32 %v773, %v793
    %797 = vrot.lane.b32.xlu0 %v795, 32
    %v798 = vpop.permute.xlu0 %797
    %800 = vst.msk [vmem:[#allocation7] sm:$0x3] %vm343, %v798
    %802 = vrot.lane.b32.xlu0 %v789, 96
    %v803 = vpop.permute.xlu0 %802
    %805 = vst.msk [vmem:[#allocation9] sm:$0x3] %vm343, %v803
    %v806 = vld [vmem:[#allocation2 + $0xa] sm:$0x3]
    %v807 = vld [vmem:[#allocation7] sm:$0x3]
    %v808 = vld [vmem:[#allocation9] sm:$0x3]
    %v810 = vsel %vm156, %v807, 0
    %812 = vmatprep.subr.mxu0 0.0
    %813 = vmatpush1.msra.mxu0 %v50
    %814 = vmatprep.subr.mxu0 0.0
    %815 = vmatpush1.msra.mxu0 %v51
    %816 = vmatprep.subr.mxu0 0.0
    %817 = vmatpush1.msra.mxu0 %v52
    %818 = vmatprep.subr.mxu0 0.0
    %819 = vmatpush1.msra.mxu0 %v53
    %820 = vmatprep.subr.mxu0 0.0
    %821 = vmatpush1.msra.mxu0 0.0
    %822 = vmatprep.subr.mxu0 0.0
    %823 = vmatpush1.msra.mxu0 0.0
    %824 = vmatprep.subr.mxu0 0.0
    %825 = vmatpush1.msra.mxu0 0.0
    %826 = vmatprep.subr.mxu0 0.0
    %827 = vmatpush1.msra.mxu0 0.0
    %828 = vmatprep.subr.mxu0 0.0
    %829 = vmatpush1.msra.mxu0 0.0
    %830 = vmatprep.subr.mxu0 0.0
    %831 = vmatpush1.msra.mxu0 0.0
    %832 = vmatprep.subr.mxu0 0.0
    %833 = vmatpush1.msra.mxu0 0.0
    %834 = vmatprep.subr.mxu0 0.0
    %835 = vmatpush1.msra.mxu0 0.0
    %836 = vmatprep.subr.mxu0 0.0
    %837 = vmatpush1.msra.mxu0 0.0
    %838 = vmatprep.subr.mxu0 0.0
    %839 = vmatpush1.msra.mxu0 0.0
    %840 = vmatprep.subr.mxu0 0.0
    %841 = vmatpush1.msra.mxu0 0.0
    %842 = vmatprep.subr.mxu0 0.0
    %843 = vmatpush1.msra.mxu0 0.0
    %844 = vmatprep.subr.mxu0 0.0
    %845 = vmatpush1.msra.mxu0 0.0
    %846 = vmatprep.subr.mxu0 0.0
    %847 = vmatpush1.msra.mxu0 0.0
    %848 = vmatprep.subr.mxu0 0.0
    %849 = vmatpush1.msra.mxu0 0.0
    %850 = vmatprep.subr.mxu0 0.0
    %851 = vmatpush1.msra.mxu0 0.0
    %852 = vmatprep.subr.mxu0 0.0
    %853 = vmatpush1.msra.mxu0 0.0
    %854 = vmatprep.subr.mxu0 0.0
    %855 = vmatpush1.msra.mxu0 0.0
    %856 = vmatprep.subr.mxu0 0.0
    %857 = vmatpush1.msra.mxu0 0.0
    %858 = vmatprep.subr.mxu0 0.0
    %859 = vmatpush1.msra.mxu0 0.0
    %860 = vmatprep.subr.mxu0 0.0
    %861 = vmatpush1.msra.mxu0 0.0
    %862 = vmatprep.subr.mxu0 0.0
    %863 = vmatpush1.msra.mxu0 0.0
    %864 = vmatprep.subr.mxu0 0.0
    %865 = vmatpush1.msra.mxu0 0.0
    %866 = vmatprep.subr.mxu0 0.0
    %867 = vmatpush1.msra.mxu0 0.0
    %868 = vmatprep.subr.mxu0 0.0
    %869 = vmatpush1.msra.mxu0 0.0
    %870 = vmatprep.subr.mxu0 0.0
    %871 = vmatpush1.msra.mxu0 0.0
    %872 = vmatprep.subr.mxu0 0.0
    %873 = vmatpush1.msra.mxu0 0.0
    %874 = vmatprep.subr.mxu0 0.0
    %875 = vmatpush1.msra.mxu0 0.0
    %876 = vmatprep.mubr.f32.mxu0 0.0
    %877 = vmatmul.mubr.f32.gmra.mrb[0].mxu0 %v810
    %v878 = vpop.f32.mrb[0].mxu0
    %v879 = vadd.f32 %v806, %v878
    %v880 = vpop.f32.mrb[0].mxu0
    %881 = vdwg.mxu0
    %v882 = vxor.u32 %v879, 2147483648
    %v883 = vmul.f32 %v882, 1.442695
    %v884 = vpow.pop %v883
    %v885 = vadd.f32 %v884, 1.0
    %v886 = vrcp.pop %v885
    %v887 = vmul.f32 1.0, %v886
    %v888 = vtanh.pop %v879
    %890 = vrot.lane.b32.xlu0 %v808, 32
    %v891 = vpop.permute.xlu0 %890
    %v893 = vmul.f32 %v887, %v891
    %895 = vrot.lane.b32.xlu0 %v888, 64
    %v896 = vpop.permute.xlu0 %895
    %v898 = vmul.f32 %v887, %v896
    %900 = vrot.lane.b32.xlu0 %v898, 32
    %v901 = vpop.permute.xlu0 %900
    %v903 = vadd.f32 %v893, %v901
    %v904 = vtanh.pop %v903
    %906 = vrot.lane.b32.xlu0 %v904, 64
    %v907 = vpop.permute.xlu0 %906
    %v909 = vmul.f32 %v887, %v907
    %911 = vrot.lane.b32.xlu0 %v909, 32
    %v912 = vpop.permute.xlu0 %911
    %914 = vst.msk [vmem:[#allocation7] sm:$0x3] %vm343, %v912
    %916 = vrot.lane.b32.xlu0 %v903, 96
    %v917 = vpop.permute.xlu0 %916
    %919 = vst.msk [vmem:[#allocation9] sm:$0x3] %vm343, %v917
    %v920 = vld [vmem:[#allocation2 + $0xc] sm:$0x3]
    %v921 = vld [vmem:[#allocation7] sm:$0x3]
    %v922 = vld [vmem:[#allocation9] sm:$0x3]
    %v924 = vsel %vm156, %v921, 0
    %926 = vmatprep.subr.mxu0 0.0
    %927 = vmatpush1.msra.mxu0 %v50
    %928 = vmatprep.subr.mxu0 0.0
    %929 = vmatpush1.msra.mxu0 %v51
    %930 = vmatprep.subr.mxu0 0.0
    %931 = vmatpush1.msra.mxu0 %v52
    %932 = vmatprep.subr.mxu0 0.0
    %933 = vmatpush1.msra.mxu0 %v53
    %934 = vmatprep.subr.mxu0 0.0
    %935 = vmatpush1.msra.mxu0 0.0
    %936 = vmatprep.subr.mxu0 0.0
    %937 = vmatpush1.msra.mxu0 0.0
    %938 = vmatprep.subr.mxu0 0.0
    %939 = vmatpush1.msra.mxu0 0.0
    %940 = vmatprep.subr.mxu0 0.0
    %941 = vmatpush1.msra.mxu0 0.0
    %942 = vmatprep.subr.mxu0 0.0
    %943 = vmatpush1.msra.mxu0 0.0
    %944 = vmatprep.subr.mxu0 0.0
    %945 = vmatpush1.msra.mxu0 0.0
    %946 = vmatprep.subr.mxu0 0.0
    %947 = vmatpush1.msra.mxu0 0.0
    %948 = vmatprep.subr.mxu0 0.0
    %949 = vmatpush1.msra.mxu0 0.0
    %950 = vmatprep.subr.mxu0 0.0
    %951 = vmatpush1.msra.mxu0 0.0
    %952 = vmatprep.subr.mxu0 0.0
    %953 = vmatpush1.msra.mxu0 0.0
    %954 = vmatprep.subr.mxu0 0.0
    %955 = vmatpush1.msra.mxu0 0.0
    %956 = vmatprep.subr.mxu0 0.0
    %957 = vmatpush1.msra.mxu0 0.0
    %958 = vmatprep.subr.mxu0 0.0
    %959 = vmatpush1.msra.mxu0 0.0
    %960 = vmatprep.subr.mxu0 0.0
    %961 = vmatpush1.msra.mxu0 0.0
    %962 = vmatprep.subr.mxu0 0.0
    %963 = vmatpush1.msra.mxu0 0.0
    %964 = vmatprep.subr.mxu0 0.0
    %965 = vmatpush1.msra.mxu0 0.0
    %966 = vmatprep.subr.mxu0 0.0
    %967 = vmatpush1.msra.mxu0 0.0
    %968 = vmatprep.subr.mxu0 0.0
    %969 = vmatpush1.msra.mxu0 0.0
    %970 = vmatprep.subr.mxu0 0.0
    %971 = vmatpush1.msra.mxu0 0.0
    %972 = vmatprep.subr.mxu0 0.0
    %973 = vmatpush1.msra.mxu0 0.0
    %974 = vmatprep.subr.mxu0 0.0
    %975 = vmatpush1.msra.mxu0 0.0
    %976 = vmatprep.subr.mxu0 0.0
    %977 = vmatpush1.msra.mxu0 0.0
    %978 = vmatprep.subr.mxu0 0.0
    %979 = vmatpush1.msra.mxu0 0.0
    %980 = vmatprep.subr.mxu0 0.0
    %981 = vmatpush1.msra.mxu0 0.0
    %982 = vmatprep.subr.mxu0 0.0
    %983 = vmatpush1.msra.mxu0 0.0
    %984 = vmatprep.subr.mxu0 0.0
    %985 = vmatpush1.msra.mxu0 0.0
    %986 = vmatprep.subr.mxu0 0.0
    %987 = vmatpush1.msra.mxu0 0.0
    %988 = vmatprep.subr.mxu0 0.0
    %989 = vmatpush1.msra.mxu0 0.0
    %990 = vmatprep.mubr.f32.mxu0 0.0
    %991 = vmatmul.mubr.f32.gmra.mrb[0].mxu0 %v924
    %v992 = vpop.f32.mrb[0].mxu0
    %v993 = vadd.f32 %v920, %v992
    %v994 = vpop.f32.mrb[0].mxu0
    %995 = vdwg.mxu0
    %v996 = vxor.u32 %v993, 2147483648
    %v997 = vmul.f32 %v996, 1.442695
    %v998 = vpow.pop %v997
    %v999 = vadd.f32 %v998, 1.0
    %v1000 = vrcp.pop %v999
    %v1001 = vmul.f32 1.0, %v1000
    %v1002 = vtanh.pop %v993
    %1004 = vrot.lane.b32.xlu0 %v922, 32
    %v1005 = vpop.permute.xlu0 %1004
    %v1007 = vmul.f32 %v1001, %v1005
    %1009 = vrot.lane.b32.xlu0 %v1002, 64
    %v1010 = vpop.permute.xlu0 %1009
    %v1012 = vmul.f32 %v1001, %v1010
    %1014 = vrot.lane.b32.xlu0 %v1012, 32
    %v1015 = vpop.permute.xlu0 %1014
    %v1017 = vadd.f32 %v1007, %v1015
    %v1018 = vtanh.pop %v1017
    %1020 = vrot.lane.b32.xlu0 %v1018, 64
    %v1021 = vpop.permute.xlu0 %1020
    %v1023 = vmul.f32 %v1001, %v1021
    %1025 = vrot.lane.b32.xlu0 %v1023, 32
    %v1026 = vpop.permute.xlu0 %1025
    %1028 = vst.msk [vmem:[#allocation7] sm:$0x3] %vm343, %v1026
    %1030 = vrot.lane.b32.xlu0 %v1017, 96
    %v1031 = vpop.permute.xlu0 %1030
    %1033 = vst.msk [vmem:[#allocation9] sm:$0x3] %vm343, %v1031
    %v1034 = vld [vmem:[#allocation2 + $0xe] sm:$0x3]
    %v1035 = vld [vmem:[#allocation7] sm:$0x3]
    %v1036 = vld [vmem:[#allocation9] sm:$0x3]
    %v1038 = vsel %vm156, %v1035, 0
    %1040 = vmatprep.subr.mxu0 0.0
    %1041 = vmatpush1.msra.mxu0 %v50
    %1042 = vmatprep.subr.mxu0 0.0
    %1043 = vmatpush1.msra.mxu0 %v51
    %1044 = vmatprep.subr.mxu0 0.0
    %1045 = vmatpush1.msra.mxu0 %v52
    %1046 = vmatprep.subr.mxu0 0.0
    %1047 = vmatpush1.msra.mxu0 %v53
    %1048 = vmatprep.subr.mxu0 0.0
    %1049 = vmatpush1.msra.mxu0 0.0
    %1050 = vmatprep.subr.mxu0 0.0
    %1051 = vmatpush1.msra.mxu0 0.0
    %1052 = vmatprep.subr.mxu0 0.0
    %1053 = vmatpush1.msra.mxu0 0.0
    %1054 = vmatprep.subr.mxu0 0.0
    %1055 = vmatpush1.msra.mxu0 0.0
    %1056 = vmatprep.subr.mxu0 0.0
    %1057 = vmatpush1.msra.mxu0 0.0
    %1058 = vmatprep.subr.mxu0 0.0
    %1059 = vmatpush1.msra.mxu0 0.0
    %1060 = vmatprep.subr.mxu0 0.0
    %1061 = vmatpush1.msra.mxu0 0.0
    %1062 = vmatprep.subr.mxu0 0.0
    %1063 = vmatpush1.msra.mxu0 0.0
    %1064 = vmatprep.subr.mxu0 0.0
    %1065 = vmatpush1.msra.mxu0 0.0
    %1066 = vmatprep.subr.mxu0 0.0
    %1067 = vmatpush1.msra.mxu0 0.0
    %1068 = vmatprep.subr.mxu0 0.0
    %1069 = vmatpush1.msra.mxu0 0.0
    %1070 = vmatprep.subr.mxu0 0.0
    %1071 = vmatpush1.msra.mxu0 0.0
    %1072 = vmatprep.subr.mxu0 0.0
    %1073 = vmatpush1.msra.mxu0 0.0
    %1074 = vmatprep.subr.mxu0 0.0
    %1075 = vmatpush1.msra.mxu0 0.0
    %1076 = vmatprep.subr.mxu0 0.0
    %1077 = vmatpush1.msra.mxu0 0.0
    %1078 = vmatprep.subr.mxu0 0.0
    %1079 = vmatpush1.msra.mxu0 0.0
    %1080 = vmatprep.subr.mxu0 0.0
    %1081 = vmatpush1.msra.mxu0 0.0
    %1082 = vmatprep.subr.mxu0 0.0
    %1083 = vmatpush1.msra.mxu0 0.0
    %1084 = vmatprep.subr.mxu0 0.0
    %1085 = vmatpush1.msra.mxu0 0.0
    %1086 = vmatprep.subr.mxu0 0.0
    %1087 = vmatpush1.msra.mxu0 0.0
    %1088 = vmatprep.subr.mxu0 0.0
    %1089 = vmatpush1.msra.mxu0 0.0
    %1090 = vmatprep.subr.mxu0 0.0
    %1091 = vmatpush1.msra.mxu0 0.0
    %1092 = vmatprep.subr.mxu0 0.0
    %1093 = vmatpush1.msra.mxu0 0.0
    %1094 = vmatprep.subr.mxu0 0.0
    %1095 = vmatpush1.msra.mxu0 0.0
    %1096 = vmatprep.subr.mxu0 0.0
    %1097 = vmatpush1.msra.mxu0 0.0
    %1098 = vmatprep.subr.mxu0 0.0
    %1099 = vmatpush1.msra.mxu0 0.0
    %1100 = vmatprep.subr.mxu0 0.0
    %1101 = vmatpush1.msra.mxu0 0.0
    %1102 = vmatprep.subr.mxu0 0.0
    %1103 = vmatpush1.msra.mxu0 0.0
    %1104 = vmatprep.mubr.f32.mxu0 0.0
    %1105 = vmatmul.mubr.f32.gmra.mrb[0].mxu0 %v1038
    %v1106 = vpop.f32.mrb[0].mxu0
    %v1107 = vadd.f32 %v1034, %v1106
    %v1108 = vpop.f32.mrb[0].mxu0
    %1109 = vdwg.mxu0
    %v1110 = vxor.u32 %v1107, 2147483648
    %v1111 = vmul.f32 %v1110, 1.442695
    %v1112 = vpow.pop %v1111
    %v1113 = vadd.f32 %v1112, 1.0
    %v1114 = vrcp.pop %v1113
    %v1115 = vmul.f32 1.0, %v1114
    %v1116 = vtanh.pop %v1107
    %1118 = vrot.lane.b32.xlu0 %v1036, 32
    %v1119 = vpop.permute.xlu0 %1118
    %v1121 = vmul.f32 %v1115, %v1119
    %1123 = vrot.lane.b32.xlu0 %v1116, 64
    %v1124 = vpop.permute.xlu0 %1123
    %v1126 = vmul.f32 %v1115, %v1124
    %1128 = vrot.lane.b32.xlu0 %v1126, 32
    %v1129 = vpop.permute.xlu0 %1128
    %v1131 = vadd.f32 %v1121, %v1129
    %v1132 = vtanh.pop %v1131
    %1134 = vrot.lane.b32.xlu0 %v1132, 64
    %v1135 = vpop.permute.xlu0 %1134
    %v1137 = vmul.f32 %v1115, %v1135
    %1139 = vrot.lane.b32.xlu0 %v1137, 32
    %v1140 = vpop.permute.xlu0 %1139
    %1142 = vst.msk [vmem:[#allocation7] sm:$0x3] %vm343, %v1140
    %1144 = vrot.lane.b32.xlu0 %v1131, 96
    %v1145 = vpop.permute.xlu0 %1144
    %1147 = vst.msk [vmem:[#allocation9] sm:$0x3] %vm343, %v1145
    // Predicated region
    $region38: #{tpu_custom_call.1} parent=1 // pred_check
      _
    $region39: #{tpu_custom_call.1} parent=1 // pred_check_branch
      %1149 = sbr.rel (0) target = $region41
    $region40: #{tpu_custom_call.1} parent=1 // pred_region
      %s1151 = ssub.s32 32, 32
      %1152 = vsyncadd [#allocation5], %s1151
      %s1154 = sshll.u32 [#allocation6], 4
      %s1155 = int_to_ptr.vmem [resolvable:$true] %s1154
      %1157 = dma.vmem_to_hbm [thread:$0]  %s1155, 32, %s8, [#allocation5]
    $region41: #{tpu_custom_call.1} parent=1 // pred_fallthru
      _
    // Predicated region
    $region42: #{tpu_custom_call.1} parent=1 // pred_check
      _
    $region43: #{tpu_custom_call.1} parent=1 // pred_check_branch
      %1159 = sbr.rel (0) target = $region45
    $region44: #{tpu_custom_call.1} parent=1 // pred_region
      %s1161 = ssub.s32 32, 32
      %1162 = vsyncadd [#allocation8], %s1161
      %s1164 = sshll.u32 [#allocation7], 4
      %s1165 = int_to_ptr.vmem [resolvable:$true] %s1164
      %1167 = dma.vmem_to_hbm [thread:$0]  %s1165, 32, %s9, [#allocation8]
    $region45: #{tpu_custom_call.1} parent=1 // pred_fallthru
      _
    // Predicated region
    $region46: #{tpu_custom_call.1} parent=1 // pred_check
      _
    $region47: #{tpu_custom_call.1} parent=1 // pred_check_branch
      %1169 = sbr.rel (0) target = $region49
    $region48: #{tpu_custom_call.1} parent=1 // pred_region
      %s1171 = ssub.s32 32, 32
      %1172 = vsyncadd [#allocation8], %s1171
      %s1174 = sshll.u32 [#allocation9], 4
      %s1175 = int_to_ptr.vmem [resolvable:$true] %s1174
      %1177 = dma.vmem_to_hbm [thread:$0]  %s1175, 32, %s10, [#allocation8]
    $region49: #{tpu_custom_call.1} parent=1 // pred_fallthru
      _
    // Predicated region
    $region50: #{tpu_custom_call.1} parent=1 // pred_check
      _
    $region51: #{tpu_custom_call.1} parent=1 // pred_check_branch
      %1179 = sbr.rel (0) target = $region53
    $region52: #{tpu_custom_call.1} parent=1 // pred_region
      %1180 = dma.done [#allocation5], 32
    $region53: #{tpu_custom_call.1} parent=1 // pred_fallthru
      _
    // Predicated region
    $region54: #{tpu_custom_call.1} parent=1 // pred_check
      _
    $region55: #{tpu_custom_call.1} parent=1 // pred_check_branch
      %1182 = sbr.rel (0) target = $region57
    $region56: #{tpu_custom_call.1} parent=1 // pred_region
      %1183 = dma.done [#allocation8], 32
    $region57: #{tpu_custom_call.1} parent=1 // pred_fallthru
      _
    // Predicated region
    $region58: #{tpu_custom_call.1} parent=1 // pred_check
      _
    $region59: #{tpu_custom_call.1} parent=1 // pred_check_branch
      %1185 = sbr.rel (0) target = $region61
    $region60: #{tpu_custom_call.1} parent=1 // pred_region
      %1186 = dma.done [#allocation8], 32
    $region61: #{tpu_custom_call.1} parent=1 // pred_fallthru
      _
    %1187 = vsyncpa [#allocation4], 1
    %1188 = vsyncpa [#allocation5], 1
    %1189 = vsyncpa [#allocation8], 1

</llo_original>
